<compile_context>
chip_gen: v5e
topology: v5e:2x2
jax: 0.10.0
libtpu: 0.0.40
codegen_flags: <defaults>
</compile_context>

<pallas_src>
import numpy as np
import jax
import jax.numpy as jnp
from jax.experimental import pallas as pl
from jax.experimental.pallas import tpu as pltpu

# ---------------- model dimensions (small, consistent with the module) -------
B, S, E = 2, 8, 32          # batch, seq_len, embedding_dim
H = 32                      # hidden_dim (bidirectional => H2 per direction)
H2 = H // 2
NC, DC = 5, 5               # num_capsule, dim_capsule
ROUTINGS = 4
CAP_OUT = 1
HFC = 16                    # hidden_dim_fc
VOCAB = 50
FEAT = 4 * H + CAP_OUT      # 129 = concat(att1, att2, avg, max, caps_out)
SB = S * B

VMEM_SPEC = pl.BlockSpec(memory_space=pltpu.MemorySpace.VMEM)


# ---------------- parameter-slab layout (shared by host packer & kernel) -----
def _align8(n):
    return ((n + 7) // 8) * 8


def _build_layout():
    entries = [
        ('w_emb_lstm', VOCAB, 4 * H),   # emb_mean @ Wih_lstm (fused)
        ('b_lstm',     1,     4 * H),
        ('whh_lstm',   H,     4 * H),
        ('mask_lstm',  1,     4 * H),
        ('rev',        SB,    SB),      # time-reversal permutation
        ('wih_gru',    H,     3 * H),
        ('whh_gru',    H,     3 * H),
        ('bih_gru',    1,     3 * H),
        ('bhh_gru',    1,     3 * H),
        ('mask_gru',   1,     3 * H),
        ('caps_w',     H,     NC * DC),
        ('seg',        NC * DC, NC * DC),
        ('lincaps_w',  1,     NC * DC),
        ('att_w',      2 * H, 2),
        ('att_bias',   SB,    2),
        ('ln_g128',    1,     4 * H),
        ('ln_b128',    1,     4 * H),
        ('fc_w128',    4 * H, HFC),
        ('fc_wc3',     1,     HFC),
        ('fc_b',       1,     HFC),
        ('out_w',      1,     HFC),
        ('pool',       B,     SB),      # time-sum selection matrix
        ('scalars',    1,     4),       # [lincaps_b, ln_gamma_c3, ln_beta_c3, out_b]
    ]
    layout, r = {}, 0
    for name, nr, nc in entries:
        layout[name] = (r, nr, nc)
        r += _align8(nr)
    return layout, _align8(r)


LAYOUT, SLAB_ROWS = _build_layout()


# ---------------- the single fused kernel ------------------------------------
def toxic_fused_kernel(seq_ref, slab_ref, o_ref):
    f32 = jnp.float32

    def P(name):                           # static slab slice (compile-time offsets)
        r, nr, nc = LAYOUT[name]
        return slab_ref[r:r + nr, 0:nc]

    pool = P('pool')                       # (B, SB)   time-sum selection per batch row
    rev = P('rev')                         # (SB, SB)  reverses the time blocks

    def time_sum(x):                       # (SB, F) time-major -> (B, F)
        return jnp.dot(pool, x, preferred_element_type=f32)

    def tree(op, vals):                    # balanced reduction over a Python list
        vals = list(vals)
        while len(vals) > 1:
            nxt = [op(vals[2 * i], vals[2 * i + 1]) for i in range(len(vals) // 2)]
            if len(vals) & 1:
                nxt.append(vals[-1])
            vals = nxt
        return vals[0]

    # ---- embedding lookup fused into the LSTM input projection --------------
    # onehot(seq) @ (emb_mean @ Wih_lstm) == emb @ Wih_lstm (spatial dropout = id).
    vocab_iota = jax.lax.broadcasted_iota(jnp.int32, (SB, VOCAB), 1)
    onehot = (vocab_iota == seq_ref[...]).astype(f32)                     # (SB,V)
    gi_l = jnp.dot(onehot, P('w_emb_lstm'),
                   preferred_element_type=f32) + P('b_lstm')              # (SB,128)
    # hoisted direction merge: fwd lanes read time k, bwd lanes read time S-1-k
    gi_l = jnp.where(P('mask_lstm') > 0.5, gi_l,
                     jnp.dot(rev, gi_l, preferred_element_type=f32))

    # ---- fused bidirectional LSTM (rnn0): one unrolled recurrence ------------
    # Gate lanes: [i_f|i_b, f_f|f_b, g_f|g_b, o_f|o_b], each block H=32 wide.
    whh_l = P('whh_lstm')                  # (H, 4H) block-diagonal
    h = jnp.zeros((B, H), f32)             # [h_fwd(16) | h_bwd(16)]
    c = jnp.zeros((B, H), f32)
    hs0 = []
    for k in range(S):                     # fully unrolled (S static)
        g = gi_l[k * B:(k + 1) * B, :] + jnp.dot(h, whh_l,
                                                 preferred_element_type=f32)
        sg = jax.nn.sigmoid(g)             # one EUP pass covers i|f|o lanes
        gg = jnp.tanh(g[:, 2 * H:3 * H])   # g block
        c = sg[:, H:2 * H] * c + sg[:, 0:H] * gg
        h = sg[:, 3 * H:4 * H] * jnp.tanh(c)
        hs0.append(h)                      # register-resident history
    hist0 = jnp.concatenate(hs0, axis=0)            # (SB,H) step-major
    hist0r = jnp.concatenate(hs0[::-1], axis=0)     # time-reversed
    lstm0 = jnp.concatenate([hist0[:, 0:H2], hist0r[:, H2:H]], axis=-1)   # (SB,H)

    # ---- fused bidirectional GRU (rnn1) ---------------------------------------
    gi_g = jnp.dot(lstm0, P('wih_gru'),
                   preferred_element_type=f32) + P('bih_gru')             # (SB,96)
    gi_g = jnp.where(P('mask_gru') > 0.5, gi_g,
                     jnp.dot(rev, gi_g, preferred_element_type=f32))
    whh_g = P('whh_gru')
    bhh_g = P('bhh_gru')
    h = jnp.zeros((B, H), f32)
    hs1 = []
    for k in range(S):
        gi = gi_g[k * B:(k + 1) * B, :]
        gh = jnp.dot(h, whh_g, preferred_element_type=f32) + bhh_g        # (B,96)
        rz = jax.nn.sigmoid(gi[:, 0:2 * H] + gh[:, 0:2 * H])              # r|z
        n = jnp.tanh(gi[:, 2 * H:3 * H] + rz[:, 0:H] * gh[:, 2 * H:3 * H])
        z = rz[:, H:2 * H]
        h = (1.0 - z) * n + z * h
        hs1.append(h)
    hist1 = jnp.concatenate(hs1, axis=0)
    hist1r = jnp.concatenate(hs1[::-1], axis=0)
    lstm1 = jnp.concatenate([hist1[:, 0:H2], hist1r[:, H2:H]], axis=-1)   # (SB,H)

    # ---- capsule routing (vectorized over capsules, iteration 0 peeled) ------
    seg = P('seg')                         # (25,25) block-diag ones (DC segments)
    u = jnp.dot(lstm1, P('caps_w'), preferred_element_type=f32)           # (SB,25)
    # iteration 0: b == 0  =>  softmax over capsules is uniform 1/NC
    s_vec = time_sum(u) * (1.0 / NC)                                      # (B,25)
    v = s_vec * jax.lax.rsqrt(
        jnp.dot(s_vec * s_vec, seg, preferred_element_type=f32) + 1e-7)   # squash
    for _ in range(ROUTINGS - 1):
        v_t = jnp.concatenate([v] * S, axis=0)        # batch broadcast over time
        b_log = jnp.dot(v_t * u, seg, preferred_element_type=f32)         # (SB,25)
        e = jnp.exp(b_log - jnp.max(b_log, axis=-1, keepdims=True))
        c_r = e * (float(DC) * pl.reciprocal(
            jnp.sum(e, axis=-1, keepdims=True), approx=True))             # softmax/NC
        s_vec = time_sum(c_r * u)
        v = s_vec * jax.lax.rsqrt(
            jnp.dot(s_vec * s_vec, seg, preferred_element_type=f32) + 1e-7)

    sc = P('scalars')                      # (1,4): lincaps_b, ln_g_c3, ln_b_c3, out_b
    c3 = jnp.maximum(jnp.sum(v * P('lincaps_w'), axis=-1, keepdims=True)
                     + sc[:, 0:1], 0.0)                                   # (B,1)

    # ---- both attentions share one score matmul -------------------------------
    x_cat = jnp.concatenate([lstm0, lstm1], axis=-1)                      # (SB,2H)
    scores = (jnp.dot(x_cat, P('att_w'), preferred_element_type=f32)
              + P('att_bias'))                                            # (SB,2)
    aw = jnp.exp(jnp.tanh(scores))
    inv_den = pl.reciprocal(time_sum(aw) + 1e-7, approx=True)             # (B,2)
    att1 = time_sum(aw[:, 0:1] * lstm0) * inv_den[:, 0:1]                 # (B,H)
    att2 = time_sum(aw[:, 1:2] * lstm1) * inv_den[:, 1:2]                 # (B,H)

    # ---- pools: tree reductions over register-resident step values ------------
    # (mean/max over time are permutation-invariant, so step order is fine)
    avg2 = tree(jnp.add, hs1) * (1.0 / S)                                 # (B,H)
    mx = tree(jnp.maximum, hs1)                                           # (B,H)

    # ---- head: LayerNorm(129) split at the 128-lane boundary + MLP -----------
    feat128 = jnp.concatenate([att1, att2, avg2, mx], axis=-1)            # (B,128)
    mu = (jnp.sum(feat128, axis=-1, keepdims=True) + c3) * (1.0 / FEAT)
    d128 = feat128 - mu
    dc3 = c3 - mu
    var = (jnp.sum(d128 * d128, axis=-1, keepdims=True) + dc3 * dc3) * (1.0 / FEAT)
    inv = jax.lax.rsqrt(var + 1e-5)
    y128 = jnp.maximum(d128 * inv * P('ln_g128') + P('ln_b128'), 0.0)
    yc3 = jnp.maximum(dc3 * inv * sc[:, 1:2] + sc[:, 2:3], 0.0)
    hid = (jnp.dot(y128, P('fc_w128'), preferred_element_type=f32)
           + yc3 * P('fc_wc3') + P('fc_b'))                               # (B,HFC)
    o_ref[...] = (jnp.sum(hid * P('out_w'), axis=-1, keepdims=True)
                  + sc[:, 3:4])                                           # (B,1)


# ---------------- parameter init (deterministic, synthetic) ------------------
def init_raw_params(key):
    keys = iter(jax.random.split(key, 40))

    def rnd(shape, scale=0.1):
        return scale * jax.random.normal(next(keys), shape, dtype=jnp.float32)

    p = {}
    emb0 = rnd((VOCAB, E), 1.0)
    emb1 = rnd((VOCAB, E), 1.0)
    emb_mean = (emb0 + emb1) * 0.5                 # embedding_mode='mean'
    p['emb_mean'] = emb_mean.at[0].set(0.0)        # padding_idx=0 row is zero
    for d in ('f', 'b'):
        # LSTM weights in (in, 4*H2) layout, PyTorch gate order i,f,g,o
        p[f'lstm_wih_{d}'] = rnd((E, 4 * H2))
        p[f'lstm_whh_{d}'] = rnd((H2, 4 * H2))
        p[f'lstm_b_{d}'] = rnd((1, 4 * H2))        # b_ih + b_hh combined
        # GRU weights in (in, 3*H2) layout, PyTorch gate order r,z,n
        p[f'gru_wih_{d}'] = rnd((H, 3 * H2))
        p[f'gru_whh_{d}'] = rnd((H2, 3 * H2))
        p[f'gru_bih_{d}'] = rnd((1, 3 * H2))
        p[f'gru_bhh_{d}'] = rnd((1, 3 * H2))
    p['caps_w'] = rnd((H, NC * DC))
    p['lincaps_w'] = rnd((1, NC * DC))
    p['lincaps_b'] = rnd((1, 1))
    # attention: positional bias initialized to zeros in the module; fold the
    # attention_fc scalar bias + positional bias[:S] into one (1,S) vector.
    p['att1_w'] = rnd((1, H))
    p['att1_bias'] = jnp.zeros((1, S), jnp.float32) + rnd((1, 1))
    p['att2_w'] = rnd((1, H))
    p['att2_bias'] = jnp.zeros((1, S), jnp.float32) + rnd((1, 1))
    p['ln_gamma'] = jnp.ones((1, FEAT), jnp.float32)
    p['ln_beta'] = jnp.zeros((1, FEAT), jnp.float32)
    p['fc_w'] = rnd((FEAT, HFC))
    p['fc_b'] = rnd((1, HFC))
    p['out_w'] = rnd((1, HFC))
    p['out_b'] = rnd((1, 1))
    return p


# ---------------- host-side weight fusion + slab packing ---------------------
def _interleave_dirs(wf, wb, n_gates, per):
    # (rows, n_gates*per) x2 -> (rows, n_gates*2*per), cols [g0_f,g0_b,g1_f,...]
    blocks = []
    for q in range(n_gates):
        blocks.append(wf[:, q * per:(q + 1) * per])
        blocks.append(wb[:, q * per:(q + 1) * per])
    return jnp.concatenate(blocks, axis=-1)


def _blockdiag_hh(hf, hb, n_gates, per):
    # (per, n_gates*per) x2 -> (2*per, n_gates*2*per), rows [h_fwd ; h_bwd]
    z = jnp.zeros((per, per), jnp.float32)
    blocks = []
    for q in range(n_gates):
        blocks.append(jnp.concatenate([hf[:, q * per:(q + 1) * per], z], axis=0))
        blocks.append(jnp.concatenate([z, hb[:, q * per:(q + 1) * per]], axis=0))
    return jnp.concatenate(blocks, axis=-1)


def _dir_mask(n_gates, per):
    one = jnp.ones((1, per), jnp.float32)
    zero = jnp.zeros((1, per), jnp.float32)
    return jnp.concatenate([jnp.concatenate([one, zero], axis=-1)
                            for _ in range(n_gates)], axis=-1)


def pack_slab(arrs):
    slab = np.zeros((SLAB_ROWS, 128), np.float32)
    for name, a in arrs.items():
        r, nr, nc = LAYOUT[name]
        a = np.asarray(a, np.float32)
        assert a.shape == (nr, nc), (name, a.shape, (nr, nc))
        slab[r:r + nr, :nc] = a
    return jnp.asarray(slab)


def fuse_params(p):
    arrs = {}
    # recurrent fusions (fwd/bwd merged, gates interleaved per direction)
    wih_l = _interleave_dirs(p['lstm_wih_f'], p['lstm_wih_b'], 4, H2)   # (E,128)
    arrs['w_emb_lstm'] = jnp.dot(p['emb_mean'], wih_l)                  # (V,128)
    arrs['b_lstm'] = _interleave_dirs(p['lstm_b_f'], p['lstm_b_b'], 4, H2)
    arrs['whh_lstm'] = _blockdiag_hh(p['lstm_whh_f'], p['lstm_whh_b'], 4, H2)
    arrs['mask_lstm'] = _dir_mask(4, H2)
    arrs['wih_gru'] = _interleave_dirs(p['gru_wih_f'], p['gru_wih_b'], 3, H2)
    arrs['whh_gru'] = _blockdiag_hh(p['gru_whh_f'], p['gru_whh_b'], 3, H2)
    arrs['bih_gru'] = _interleave_dirs(p['gru_bih_f'], p['gru_bih_b'], 3, H2)
    arrs['bhh_gru'] = _interleave_dirs(p['gru_bhh_f'], p['gru_bhh_b'], 3, H2)
    arrs['mask_gru'] = _dir_mask(3, H2)
    arrs['caps_w'] = p['caps_w']
    arrs['lincaps_w'] = p['lincaps_w']

    # both attentions in one matmul: (2H,2) block weight + per-time-row bias
    zc = jnp.zeros((H, 1), jnp.float32)
    arrs['att_w'] = jnp.concatenate(
        [jnp.concatenate([p['att1_w'].T, zc], axis=1),
         jnp.concatenate([zc, p['att2_w'].T], axis=1)], axis=0)          # (2H,2)
    bias_s = jnp.concatenate([p['att1_bias'].T, p['att2_bias'].T], axis=-1)
    arrs['att_bias'] = jnp.repeat(bias_s, B, axis=0)                     # (SB,2)

    # LayerNorm / fc split at the 128-lane boundary (feature #128 = capsule c3)
    arrs['ln_g128'] = p['ln_gamma'][:, :4 * H]
    arrs['ln_b128'] = p['ln_beta'][:, :4 * H]
    arrs['fc_w128'] = p['fc_w'][:4 * H, :]
    arrs['fc_wc3'] = p['fc_w'][4 * H:, :]
    arrs['fc_b'] = p['fc_b']
    arrs['out_w'] = p['out_w']
    arrs['scalars'] = jnp.concatenate(
        [p['lincaps_b'], p['ln_gamma'][:, 4 * H:], p['ln_beta'][:, 4 * H:],
         p['out_b']], axis=-1)                                           # (1,4)

    # constant index-map matrices: time pooling, time reversal, DC-segment sums
    pool = np.zeros((B, SB), np.float32)
    rev = np.zeros((SB, SB), np.float32)
    for t in range(S):
        for b in range(B):
            pool[b, t * B + b] = 1.0
            rev[t * B + b, (S - 1 - t) * B + b] = 1.0
    seg = np.zeros((NC * DC, NC * DC), np.float32)
    for n in range(NC):
        seg[n * DC:(n + 1) * DC, n * DC:(n + 1) * DC] = 1.0
    arrs['pool'] = pool
    arrs['rev'] = rev
    arrs['seg'] = seg
    return pack_slab(arrs)


# ---------------- full forward: ONE fused, grid-less pallas_call -------------
@jax.jit
def toxic_forward(seqs, lens, slab):
    del lens  # the reference forward also ignores lens (no masking applied)
    seq_tm = jnp.transpose(seqs, (1, 0)).reshape(SB, 1).astype(jnp.int32)
    return pl.pallas_call(
        toxic_fused_kernel,
        out_shape=jax.ShapeDtypeStruct((B, 1), jnp.float32),
        in_specs=[VMEM_SPEC, VMEM_SPEC],
        out_specs=VMEM_SPEC,
    )(seq_tm, slab)


if __name__ == "__main__":
    key = jax.random.PRNGKey(0)
    pkey, skey = jax.random.split(key)
    raw = init_raw_params(pkey)
    slab = fuse_params(raw)
    seqs = jax.random.randint(skey, (B, S), 1, VOCAB, dtype=jnp.int32)
    lens = jnp.full((B,), S, dtype=jnp.int32)
    out = toxic_forward(seqs, lens, slab)
    jax.block_until_ready(out)
    assert out.shape == (B, 1)
    print("KERNEL_OK")
</pallas_src>

<mosaic_0001>
module attributes {stable_mosaic.version = 11 : i64} {
  func.func @toxic_fused_kernel(%arg0: memref<16x1xi32, #tpu.memory_space<vmem>>, %arg1: memref<544x128xf32, #tpu.memory_space<vmem>>, %arg2: memref<2x1xf32, #tpu.memory_space<vmem>>) attributes {dimension_semantics = [], scalar_prefetch = 0 : i64, scratch_operands = 0 : i64, tpu.core_type = #tpu.core_type<tc>} {
    %c528 = arith.constant 528 : index
    %c0 = arith.constant 0 : index
    %0 = vector.load %arg1[%c528, %c0] : memref<544x128xf32, #tpu.memory_space<vmem>>, vector<2x16xf32>
    %c104 = arith.constant 104 : index
    %c0_0 = arith.constant 0 : index
    %1 = vector.load %arg1[%c104, %c0_0] : memref<544x128xf32, #tpu.memory_space<vmem>>, vector<16x16xf32>
    %2 = tpu.iota {dimensions = array<i32: 1>} : vector<16x50xi32>
    %c0_1 = arith.constant 0 : index
    %c0_2 = arith.constant 0 : index
    %3 = vector.load %arg0[%c0_1, %c0_2] : memref<16x1xi32, #tpu.memory_space<vmem>>, vector<16x1xi32>
    %4 = vector.broadcast %3 : vector<16x1xi32> to vector<16x50xi32>
    %5 = arith.cmpi eq, %2, %4 : vector<16x50xi32>
    %6 = arith.extui %5 : vector<16x50xi1> to vector<16x50xi32>
    %7 = arith.sitofp %6 : vector<16x50xi32> to vector<16x50xf32>
    %c0_3 = arith.constant 0 : index
    %c0_4 = arith.constant 0 : index
    %8 = vector.load %arg1[%c0_3, %c0_4] : memref<544x128xf32, #tpu.memory_space<vmem>>, vector<50x128xf32>
    %cst = arith.constant dense<0.000000e+00> : vector<16x128xf32>
    %9 = tpu.matmul %7, %8, %cst {dimension_numbers = #tpu.dot_dimension_numbers<[1], [0], [0], [1], [0, 0, 1, 1], [], []>} : vector<16x50xf32>, vector<50x128xf32>, vector<16x128xf32> -> vector<16x128xf32>
    %c56 = arith.constant 56 : index
    %c0_5 = arith.constant 0 : index
    %10 = vector.load %arg1[%c56, %c0_5] : memref<544x128xf32, #tpu.memory_space<vmem>>, vector<1x128xf32>
    %11 = vector.broadcast %10 : vector<1x128xf32> to vector<16x128xf32>
    %12 = arith.addf %9, %11 : vector<16x128xf32>
    %c96 = arith.constant 96 : index
    %c0_6 = arith.constant 0 : index
    %13 = vector.load %arg1[%c96, %c0_6] : memref<544x128xf32, #tpu.memory_space<vmem>>, vector<1x128xf32>
    %cst_7 = arith.constant 5.000000e-01 : f32
    %14 = vector.broadcast %cst_7 : f32 to vector<1x128xf32>
    %15 = arith.cmpf ogt, %13, %14 : vector<1x128xf32>
    %cst_8 = arith.constant dense<0.000000e+00> : vector<16x128xf32>
    %16 = tpu.matmul %1, %12, %cst_8 {dimension_numbers = #tpu.dot_dimension_numbers<[1], [0], [0], [1], [0, 0, 1, 1], [], []>} : vector<16x16xf32>, vector<16x128xf32>, vector<16x128xf32> -> vector<16x128xf32>
    %17 = vector.shape_cast %15 : vector<1x128xi1> to vector<1x128xi1>
    %18 = vector.broadcast %17 : vector<1x128xi1> to vector<16x128xi1>
    %19 = arith.select %18, %12, %16 : vector<16x128xi1>, vector<16x128xf32>
    %c64 = arith.constant 64 : index
    %c0_9 = arith.constant 0 : index
    %20 = vector.load %arg1[%c64, %c0_9] : memref<544x128xf32, #tpu.memory_space<vmem>>, vector<32x128xf32>
    %cst_10 = arith.constant 0.000000e+00 : f32
    %21 = vector.broadcast %cst_10 : f32 to vector<2x32xf32>
    %cst_11 = arith.constant 0.000000e+00 : f32
    %22 = vector.broadcast %cst_11 : f32 to vector<2x32xf32>
    %23 = vector.extract_strided_slice %19 {offsets = [0, 0], sizes = [2, 128], strides = [1, 1]} : vector<16x128xf32> to vector<2x128xf32>
    %cst_12 = arith.constant dense<0.000000e+00> : vector<2x128xf32>
    %24 = tpu.matmul %21, %20, %cst_12 {dimension_numbers = #tpu.dot_dimension_numbers<[1], [0], [0], [1], [0, 0, 1, 1], [], []>} : vector<2x32xf32>, vector<32x128xf32>, vector<2x128xf32> -> vector<2x128xf32>
    %25 = arith.addf %23, %24 : vector<2x128xf32>
    %26 = arith.negf %25 : vector<2x128xf32>
    %27 = math.exp %26 : vector<2x128xf32>
    %cst_13 = arith.constant 1.000000e+00 : f32
    %28 = vector.broadcast %cst_13 : f32 to vector<2x128xf32>
    %29 = arith.addf %28, %27 : vector<2x128xf32>
    %30 = arith.divf %28, %29 : vector<2x128xf32>
    %31 = vector.extract_strided_slice %25 {offsets = [0, 64], sizes = [2, 32], strides = [1, 1]} : vector<2x128xf32> to vector<2x32xf32>
    %32 = math.tanh %31 : vector<2x32xf32>
    %33 = vector.extract_strided_slice %30 {offsets = [0, 32], sizes = [2, 32], strides = [1, 1]} : vector<2x128xf32> to vector<2x32xf32>
    %34 = arith.mulf %33, %22 : vector<2x32xf32>
    %35 = vector.extract_strided_slice %30 {offsets = [0, 0], sizes = [2, 32], strides = [1, 1]} : vector<2x128xf32> to vector<2x32xf32>
    %36 = arith.mulf %35, %32 : vector<2x32xf32>
    %37 = arith.addf %34, %36 : vector<2x32xf32>
    %38 = vector.extract_strided_slice %30 {offsets = [0, 96], sizes = [2, 32], strides = [1, 1]} : vector<2x128xf32> to vector<2x32xf32>
    %39 = math.tanh %37 : vector<2x32xf32>
    %40 = arith.mulf %38, %39 : vector<2x32xf32>
    %41 = vector.extract_strided_slice %19 {offsets = [2, 0], sizes = [2, 128], strides = [1, 1]} : vector<16x128xf32> to vector<2x128xf32>
    %cst_14 = arith.constant dense<0.000000e+00> : vector<2x128xf32>
    %42 = tpu.matmul %40, %20, %cst_14 {dimension_numbers = #tpu.dot_dimension_numbers<[1], [0], [0], [1], [0, 0, 1, 1], [], []>} : vector<2x32xf32>, vector<32x128xf32>, vector<2x128xf32> -> vector<2x128xf32>
    %43 = arith.addf %41, %42 : vector<2x128xf32>
    %44 = arith.negf %43 : vector<2x128xf32>
    %45 = math.exp %44 : vector<2x128xf32>
    %cst_15 = arith.constant 1.000000e+00 : f32
    %46 = vector.broadcast %cst_15 : f32 to vector<2x128xf32>
    %47 = arith.addf %46, %45 : vector<2x128xf32>
    %48 = arith.divf %46, %47 : vector<2x128xf32>
    %49 = vector.extract_strided_slice %43 {offsets = [0, 64], sizes = [2, 32], strides = [1, 1]} : vector<2x128xf32> to vector<2x32xf32>
    %50 = math.tanh %49 : vector<2x32xf32>
    %51 = vector.extract_strided_slice %48 {offsets = [0, 32], sizes = [2, 32], strides = [1, 1]} : vector<2x128xf32> to vector<2x32xf32>
    %52 = arith.mulf %51, %37 : vector<2x32xf32>
    %53 = vector.extract_strided_slice %48 {offsets = [0, 0], sizes = [2, 32], strides = [1, 1]} : vector<2x128xf32> to vector<2x32xf32>
    %54 = arith.mulf %53, %50 : vector<2x32xf32>
    %55 = arith.addf %52, %54 : vector<2x32xf32>
    %56 = vector.extract_strided_slice %48 {offsets = [0, 96], sizes = [2, 32], strides = [1, 1]} : vector<2x128xf32> to vector<2x32xf32>
    %57 = math.tanh %55 : vector<2x32xf32>
    %58 = arith.mulf %56, %57 : vector<2x32xf32>
    %59 = vector.extract_strided_slice %19 {offsets = [4, 0], sizes = [2, 128], strides = [1, 1]} : vector<16x128xf32> to vector<2x128xf32>
    %cst_16 = arith.constant dense<0.000000e+00> : vector<2x128xf32>
    %60 = tpu.matmul %58, %20, %cst_16 {dimension_numbers = #tpu.dot_dimension_numbers<[1], [0], [0], [1], [0, 0, 1, 1], [], []>} : vector<2x32xf32>, vector<32x128xf32>, vector<2x128xf32> -> vector<2x128xf32>
    %61 = arith.addf %59, %60 : vector<2x128xf32>
    %62 = arith.negf %61 : vector<2x128xf32>
    %63 = math.exp %62 : vector<2x128xf32>
    %cst_17 = arith.constant 1.000000e+00 : f32
    %64 = vector.broadcast %cst_17 : f32 to vector<2x128xf32>
    %65 = arith.addf %64, %63 : vector<2x128xf32>
    %66 = arith.divf %64, %65 : vector<2x128xf32>
    %67 = vector.extract_strided_slice %61 {offsets = [0, 64], sizes = [2, 32], strides = [1, 1]} : vector<2x128xf32> to vector<2x32xf32>
    %68 = math.tanh %67 : vector<2x32xf32>
    %69 = vector.extract_strided_slice %66 {offsets = [0, 32], sizes = [2, 32], strides = [1, 1]} : vector<2x128xf32> to vector<2x32xf32>
    %70 = arith.mulf %69, %55 : vector<2x32xf32>
    %71 = vector.extract_strided_slice %66 {offsets = [0, 0], sizes = [2, 32], strides = [1, 1]} : vector<2x128xf32> to vector<2x32xf32>
    %72 = arith.mulf %71, %68 : vector<2x32xf32>
    %73 = arith.addf %70, %72 : vector<2x32xf32>
    %74 = vector.extract_strided_slice %66 {offsets = [0, 96], sizes = [2, 32], strides = [1, 1]} : vector<2x128xf32> to vector<2x32xf32>
    %75 = math.tanh %73 : vector<2x32xf32>
    %76 = arith.mulf %74, %75 : vector<2x32xf32>
    %77 = vector.extract_strided_slice %19 {offsets = [6, 0], sizes = [2, 128], strides = [1, 1]} : vector<16x128xf32> to vector<2x128xf32>
    %cst_18 = arith.constant dense<0.000000e+00> : vector<2x128xf32>
    %78 = tpu.matmul %76, %20, %cst_18 {dimension_numbers = #tpu.dot_dimension_numbers<[1], [0], [0], [1], [0, 0, 1, 1], [], []>} : vector<2x32xf32>, vector<32x128xf32>, vector<2x128xf32> -> vector<2x128xf32>
    %79 = arith.addf %77, %78 : vector<2x128xf32>
    %80 = arith.negf %79 : vector<2x128xf32>
    %81 = math.exp %80 : vector<2x128xf32>
    %cst_19 = arith.constant 1.000000e+00 : f32
    %82 = vector.broadcast %cst_19 : f32 to vector<2x128xf32>
    %83 = arith.addf %82, %81 : vector<2x128xf32>
    %84 = arith.divf %82, %83 : vector<2x128xf32>
    %85 = vector.extract_strided_slice %79 {offsets = [0, 64], sizes = [2, 32], strides = [1, 1]} : vector<2x128xf32> to vector<2x32xf32>
    %86 = math.tanh %85 : vector<2x32xf32>
    %87 = vector.extract_strided_slice %84 {offsets = [0, 32], sizes = [2, 32], strides = [1, 1]} : vector<2x128xf32> to vector<2x32xf32>
    %88 = arith.mulf %87, %73 : vector<2x32xf32>
    %89 = vector.extract_strided_slice %84 {offsets = [0, 0], sizes = [2, 32], strides = [1, 1]} : vector<2x128xf32> to vector<2x32xf32>
    %90 = arith.mulf %89, %86 : vector<2x32xf32>
    %91 = arith.addf %88, %90 : vector<2x32xf32>
    %92 = vector.extract_strided_slice %84 {offsets = [0, 96], sizes = [2, 32], strides = [1, 1]} : vector<2x128xf32> to vector<2x32xf32>
    %93 = math.tanh %91 : vector<2x32xf32>
    %94 = arith.mulf %92, %93 : vector<2x32xf32>
    %95 = vector.extract_strided_slice %19 {offsets = [8, 0], sizes = [2, 128], strides = [1, 1]} : vector<16x128xf32> to vector<2x128xf32>
    %cst_20 = arith.constant dense<0.000000e+00> : vector<2x128xf32>
    %96 = tpu.matmul %94, %20, %cst_20 {dimension_numbers = #tpu.dot_dimension_numbers<[1], [0], [0], [1], [0, 0, 1, 1], [], []>} : vector<2x32xf32>, vector<32x128xf32>, vector<2x128xf32> -> vector<2x128xf32>
    %97 = arith.addf %95, %96 : vector<2x128xf32>
    %98 = arith.negf %97 : vector<2x128xf32>
    %99 = math.exp %98 : vector<2x128xf32>
    %cst_21 = arith.constant 1.000000e+00 : f32
    %100 = vector.broadcast %cst_21 : f32 to vector<2x128xf32>
    %101 = arith.addf %100, %99 : vector<2x128xf32>
    %102 = arith.divf %100, %101 : vector<2x128xf32>
    %103 = vector.extract_strided_slice %97 {offsets = [0, 64], sizes = [2, 32], strides = [1, 1]} : vector<2x128xf32> to vector<2x32xf32>
    %104 = math.tanh %103 : vector<2x32xf32>
    %105 = vector.extract_strided_slice %102 {offsets = [0, 32], sizes = [2, 32], strides = [1, 1]} : vector<2x128xf32> to vector<2x32xf32>
    %106 = arith.mulf %105, %91 : vector<2x32xf32>
    %107 = vector.extract_strided_slice %102 {offsets = [0, 0], sizes = [2, 32], strides = [1, 1]} : vector<2x128xf32> to vector<2x32xf32>
    %108 = arith.mulf %107, %104 : vector<2x32xf32>
    %109 = arith.addf %106, %108 : vector<2x32xf32>
    %110 = vector.extract_strided_slice %102 {offsets = [0, 96], sizes = [2, 32], strides = [1, 1]} : vector<2x128xf32> to vector<2x32xf32>
    %111 = math.tanh %109 : vector<2x32xf32>
    %112 = arith.mulf %110, %111 : vector<2x32xf32>
    %113 = vector.extract_strided_slice %19 {offsets = [10, 0], sizes = [2, 128], strides = [1, 1]} : vector<16x128xf32> to vector<2x128xf32>
    %cst_22 = arith.constant dense<0.000000e+00> : vector<2x128xf32>
    %114 = tpu.matmul %112, %20, %cst_22 {dimension_numbers = #tpu.dot_dimension_numbers<[1], [0], [0], [1], [0, 0, 1, 1], [], []>} : vector<2x32xf32>, vector<32x128xf32>, vector<2x128xf32> -> vector<2x128xf32>
    %115 = arith.addf %113, %114 : vector<2x128xf32>
    %116 = arith.negf %115 : vector<2x128xf32>
    %117 = math.exp %116 : vector<2x128xf32>
    %cst_23 = arith.constant 1.000000e+00 : f32
    %118 = vector.broadcast %cst_23 : f32 to vector<2x128xf32>
    %119 = arith.addf %118, %117 : vector<2x128xf32>
    %120 = arith.divf %118, %119 : vector<2x128xf32>
    %121 = vector.extract_strided_slice %115 {offsets = [0, 64], sizes = [2, 32], strides = [1, 1]} : vector<2x128xf32> to vector<2x32xf32>
    %122 = math.tanh %121 : vector<2x32xf32>
    %123 = vector.extract_strided_slice %120 {offsets = [0, 32], sizes = [2, 32], strides = [1, 1]} : vector<2x128xf32> to vector<2x32xf32>
    %124 = arith.mulf %123, %109 : vector<2x32xf32>
    %125 = vector.extract_strided_slice %120 {offsets = [0, 0], sizes = [2, 32], strides = [1, 1]} : vector<2x128xf32> to vector<2x32xf32>
    %126 = arith.mulf %125, %122 : vector<2x32xf32>
    %127 = arith.addf %124, %126 : vector<2x32xf32>
    %128 = vector.extract_strided_slice %120 {offsets = [0, 96], sizes = [2, 32], strides = [1, 1]} : vector<2x128xf32> to vector<2x32xf32>
    %129 = math.tanh %127 : vector<2x32xf32>
    %130 = arith.mulf %128, %129 : vector<2x32xf32>
    %131 = vector.extract_strided_slice %19 {offsets = [12, 0], sizes = [2, 128], strides = [1, 1]} : vector<16x128xf32> to vector<2x128xf32>
    %cst_24 = arith.constant dense<0.000000e+00> : vector<2x128xf32>
    %132 = tpu.matmul %130, %20, %cst_24 {dimension_numbers = #tpu.dot_dimension_numbers<[1], [0], [0], [1], [0, 0, 1, 1], [], []>} : vector<2x32xf32>, vector<32x128xf32>, vector<2x128xf32> -> vector<2x128xf32>
    %133 = arith.addf %131, %132 : vector<2x128xf32>
    %134 = arith.negf %133 : vector<2x128xf32>
    %135 = math.exp %134 : vector<2x128xf32>
    %cst_25 = arith.constant 1.000000e+00 : f32
    %136 = vector.broadcast %cst_25 : f32 to vector<2x128xf32>
    %137 = arith.addf %136, %135 : vector<2x128xf32>
    %138 = arith.divf %136, %137 : vector<2x128xf32>
    %139 = vector.extract_strided_slice %133 {offsets = [0, 64], sizes = [2, 32], strides = [1, 1]} : vector<2x128xf32> to vector<2x32xf32>
    %140 = math.tanh %139 : vector<2x32xf32>
    %141 = vector.extract_strided_slice %138 {offsets = [0, 32], sizes = [2, 32], strides = [1, 1]} : vector<2x128xf32> to vector<2x32xf32>
    %142 = arith.mulf %141, %127 : vector<2x32xf32>
    %143 = vector.extract_strided_slice %138 {offsets = [0, 0], sizes = [2, 32], strides = [1, 1]} : vector<2x128xf32> to vector<2x32xf32>
    %144 = arith.mulf %143, %140 : vector<2x32xf32>
    %145 = arith.addf %142, %144 : vector<2x32xf32>
    %146 = vector.extract_strided_slice %138 {offsets = [0, 96], sizes = [2, 32], strides = [1, 1]} : vector<2x128xf32> to vector<2x32xf32>
    %147 = math.tanh %145 : vector<2x32xf32>
    %148 = arith.mulf %146, %147 : vector<2x32xf32>
    %149 = vector.extract_strided_slice %19 {offsets = [14, 0], sizes = [2, 128], strides = [1, 1]} : vector<16x128xf32> to vector<2x128xf32>
    %cst_26 = arith.constant dense<0.000000e+00> : vector<2x128xf32>
    %150 = tpu.matmul %148, %20, %cst_26 {dimension_numbers = #tpu.dot_dimension_numbers<[1], [0], [0], [1], [0, 0, 1, 1], [], []>} : vector<2x32xf32>, vector<32x128xf32>, vector<2x128xf32> -> vector<2x128xf32>
    %151 = arith.addf %149, %150 : vector<2x128xf32>
    %152 = arith.negf %151 : vector<2x128xf32>
    %153 = math.exp %152 : vector<2x128xf32>
    %cst_27 = arith.constant 1.000000e+00 : f32
    %154 = vector.broadcast %cst_27 : f32 to vector<2x128xf32>
    %155 = arith.addf %154, %153 : vector<2x128xf32>
    %156 = arith.divf %154, %155 : vector<2x128xf32>
    %157 = vector.extract_strided_slice %151 {offsets = [0, 64], sizes = [2, 32], strides = [1, 1]} : vector<2x128xf32> to vector<2x32xf32>
    %158 = math.tanh %157 : vector<2x32xf32>
    %159 = vector.extract_strided_slice %156 {offsets = [0, 32], sizes = [2, 32], strides = [1, 1]} : vector<2x128xf32> to vector<2x32xf32>
    %160 = arith.mulf %159, %145 : vector<2x32xf32>
    %161 = vector.extract_strided_slice %156 {offsets = [0, 0], sizes = [2, 32], strides = [1, 1]} : vector<2x128xf32> to vector<2x32xf32>
    %162 = arith.mulf %161, %158 : vector<2x32xf32>
    %163 = arith.addf %160, %162 : vector<2x32xf32>
    %164 = vector.extract_strided_slice %156 {offsets = [0, 96], sizes = [2, 32], strides = [1, 1]} : vector<2x128xf32> to vector<2x32xf32>
    %165 = math.tanh %163 : vector<2x32xf32>
    %166 = arith.mulf %164, %165 : vector<2x32xf32>
    %167 = tpu.concatenate %40, %58, %76, %94, %112, %130, %148, %166 in 0 : vector<2x32xf32>, vector<2x32xf32>, vector<2x32xf32>, vector<2x32xf32>, vector<2x32xf32>, vector<2x32xf32>, vector<2x32xf32>, vector<2x32xf32> -> vector<16x32xf32>
    %168 = tpu.concatenate %166, %148, %130, %112, %94, %76, %58, %40 in 0 : vector<2x32xf32>, vector<2x32xf32>, vector<2x32xf32>, vector<2x32xf32>, vector<2x32xf32>, vector<2x32xf32>, vector<2x32xf32>, vector<2x32xf32> -> vector<16x32xf32>
    %169 = vector.extract_strided_slice %167 {offsets = [0, 0], sizes = [16, 16], strides = [1, 1]} : vector<16x32xf32> to vector<16x16xf32>
    %170 = vector.extract_strided_slice %168 {offsets = [0, 16], sizes = [16, 16], strides = [1, 1]} : vector<16x32xf32> to vector<16x16xf32>
    %171 = tpu.concatenate %169, %170 in 1 : vector<16x16xf32>, vector<16x16xf32> -> vector<16x32xf32>
    %c120 = arith.constant 120 : index
    %c0_28 = arith.constant 0 : index
    %172 = vector.load %arg1[%c120, %c0_28] : memref<544x128xf32, #tpu.memory_space<vmem>>, vector<32x96xf32>
    %cst_29 = arith.constant dense<0.000000e+00> : vector<16x96xf32>
    %173 = tpu.matmul %171, %172, %cst_29 {dimension_numbers = #tpu.dot_dimension_numbers<[1], [0], [0], [1], [0, 0, 1, 1], [], []>} : vector<16x32xf32>, vector<32x96xf32>, vector<16x96xf32> -> vector<16x96xf32>
    %c184 = arith.constant 184 : index
    %c0_30 = arith.constant 0 : index
    %174 = vector.load %arg1[%c184, %c0_30] : memref<544x128xf32, #tpu.memory_space<vmem>>, vector<1x96xf32>
    %175 = vector.broadcast %174 : vector<1x96xf32> to vector<16x96xf32>
    %176 = arith.addf %173, %175 : vector<16x96xf32>
    %c200 = arith.constant 200 : index
    %c0_31 = arith.constant 0 : index
    %177 = vector.load %arg1[%c200, %c0_31] : memref<544x128xf32, #tpu.memory_space<vmem>>, vector<1x96xf32>
    %cst_32 = arith.constant 5.000000e-01 : f32
    %178 = vector.broadcast %cst_32 : f32 to vector<1x96xf32>
    %179 = arith.cmpf ogt, %177, %178 : vector<1x96xf32>
    %cst_33 = arith.constant dense<0.000000e+00> : vector<16x96xf32>
    %180 = tpu.matmul %1, %176, %cst_33 {dimension_numbers = #tpu.dot_dimension_numbers<[1], [0], [0], [1], [0, 0, 1, 1], [], []>} : vector<16x16xf32>, vector<16x96xf32>, vector<16x96xf32> -> vector<16x96xf32>
    %181 = vector.shape_cast %179 : vector<1x96xi1> to vector<1x96xi1>
    %182 = vector.broadcast %181 : vector<1x96xi1> to vector<16x96xi1>
    %183 = arith.select %182, %176, %180 : vector<16x96xi1>, vector<16x96xf32>
    %c152 = arith.constant 152 : index
    %c0_34 = arith.constant 0 : index
    %184 = vector.load %arg1[%c152, %c0_34] : memref<544x128xf32, #tpu.memory_space<vmem>>, vector<32x96xf32>
    %c192 = arith.constant 192 : index
    %c0_35 = arith.constant 0 : index
    %185 = vector.load %arg1[%c192, %c0_35] : memref<544x128xf32, #tpu.memory_space<vmem>>, vector<1x96xf32>
    %cst_36 = arith.constant 0.000000e+00 : f32
    %186 = vector.broadcast %cst_36 : f32 to vector<2x32xf32>
    %187 = vector.extract_strided_slice %183 {offsets = [0, 0], sizes = [2, 96], strides = [1, 1]} : vector<16x96xf32> to vector<2x96xf32>
    %cst_37 = arith.constant dense<0.000000e+00> : vector<2x96xf32>
    %188 = tpu.matmul %186, %184, %cst_37 {dimension_numbers = #tpu.dot_dimension_numbers<[1], [0], [0], [1], [0, 0, 1, 1], [], []>} : vector<2x32xf32>, vector<32x96xf32>, vector<2x96xf32> -> vector<2x96xf32>
    %189 = vector.broadcast %185 : vector<1x96xf32> to vector<2x96xf32>
    %190 = arith.addf %188, %189 : vector<2x96xf32>
    %191 = vector.extract_strided_slice %187 {offsets = [0, 0], sizes = [2, 64], strides = [1, 1]} : vector<2x96xf32> to vector<2x64xf32>
    %192 = vector.extract_strided_slice %190 {offsets = [0, 0], sizes = [2, 64], strides = [1, 1]} : vector<2x96xf32> to vector<2x64xf32>
    %193 = arith.addf %191, %192 : vector<2x64xf32>
    %194 = arith.negf %193 : vector<2x64xf32>
    %195 = math.exp %194 : vector<2x64xf32>
    %cst_38 = arith.constant 1.000000e+00 : f32
    %196 = vector.broadcast %cst_38 : f32 to vector<2x64xf32>
    %197 = arith.addf %196, %195 : vector<2x64xf32>
    %198 = arith.divf %196, %197 : vector<2x64xf32>
    %199 = vector.extract_strided_slice %187 {offsets = [0, 64], sizes = [2, 32], strides = [1, 1]} : vector<2x96xf32> to vector<2x32xf32>
    %200 = vector.extract_strided_slice %198 {offsets = [0, 0], sizes = [2, 32], strides = [1, 1]} : vector<2x64xf32> to vector<2x32xf32>
    %201 = vector.extract_strided_slice %190 {offsets = [0, 64], sizes = [2, 32], strides = [1, 1]} : vector<2x96xf32> to vector<2x32xf32>
    %202 = arith.mulf %200, %201 : vector<2x32xf32>
    %203 = arith.addf %199, %202 : vector<2x32xf32>
    %204 = math.tanh %203 : vector<2x32xf32>
    %205 = vector.extract_strided_slice %198 {offsets = [0, 32], sizes = [2, 32], strides = [1, 1]} : vector<2x64xf32> to vector<2x32xf32>
    %cst_39 = arith.constant 1.000000e+00 : f32
    %206 = vector.broadcast %cst_39 : f32 to vector<2x32xf32>
    %207 = arith.subf %206, %205 : vector<2x32xf32>
    %208 = arith.mulf %207, %204 : vector<2x32xf32>
    %209 = arith.mulf %205, %186 : vector<2x32xf32>
    %210 = arith.addf %208, %209 : vector<2x32xf32>
    %211 = vector.extract_strided_slice %183 {offsets = [2, 0], sizes = [2, 96], strides = [1, 1]} : vector<16x96xf32> to vector<2x96xf32>
    %cst_40 = arith.constant dense<0.000000e+00> : vector<2x96xf32>
    %212 = tpu.matmul %210, %184, %cst_40 {dimension_numbers = #tpu.dot_dimension_numbers<[1], [0], [0], [1], [0, 0, 1, 1], [], []>} : vector<2x32xf32>, vector<32x96xf32>, vector<2x96xf32> -> vector<2x96xf32>
    %213 = vector.broadcast %185 : vector<1x96xf32> to vector<2x96xf32>
    %214 = arith.addf %212, %213 : vector<2x96xf32>
    %215 = vector.extract_strided_slice %211 {offsets = [0, 0], sizes = [2, 64], strides = [1, 1]} : vector<2x96xf32> to vector<2x64xf32>
    %216 = vector.extract_strided_slice %214 {offsets = [0, 0], sizes = [2, 64], strides = [1, 1]} : vector<2x96xf32> to vector<2x64xf32>
    %217 = arith.addf %215, %216 : vector<2x64xf32>
    %218 = arith.negf %217 : vector<2x64xf32>
    %219 = math.exp %218 : vector<2x64xf32>
    %cst_41 = arith.constant 1.000000e+00 : f32
    %220 = vector.broadcast %cst_41 : f32 to vector<2x64xf32>
    %221 = arith.addf %220, %219 : vector<2x64xf32>
    %222 = arith.divf %220, %221 : vector<2x64xf32>
    %223 = vector.extract_strided_slice %211 {offsets = [0, 64], sizes = [2, 32], strides = [1, 1]} : vector<2x96xf32> to vector<2x32xf32>
    %224 = vector.extract_strided_slice %222 {offsets = [0, 0], sizes = [2, 32], strides = [1, 1]} : vector<2x64xf32> to vector<2x32xf32>
    %225 = vector.extract_strided_slice %214 {offsets = [0, 64], sizes = [2, 32], strides = [1, 1]} : vector<2x96xf32> to vector<2x32xf32>
    %226 = arith.mulf %224, %225 : vector<2x32xf32>
    %227 = arith.addf %223, %226 : vector<2x32xf32>
    %228 = math.tanh %227 : vector<2x32xf32>
    %229 = vector.extract_strided_slice %222 {offsets = [0, 32], sizes = [2, 32], strides = [1, 1]} : vector<2x64xf32> to vector<2x32xf32>
    %cst_42 = arith.constant 1.000000e+00 : f32
    %230 = vector.broadcast %cst_42 : f32 to vector<2x32xf32>
    %231 = arith.subf %230, %229 : vector<2x32xf32>
    %232 = arith.mulf %231, %228 : vector<2x32xf32>
    %233 = arith.mulf %229, %210 : vector<2x32xf32>
    %234 = arith.addf %232, %233 : vector<2x32xf32>
    %235 = vector.extract_strided_slice %183 {offsets = [4, 0], sizes = [2, 96], strides = [1, 1]} : vector<16x96xf32> to vector<2x96xf32>
    %cst_43 = arith.constant dense<0.000000e+00> : vector<2x96xf32>
    %236 = tpu.matmul %234, %184, %cst_43 {dimension_numbers = #tpu.dot_dimension_numbers<[1], [0], [0], [1], [0, 0, 1, 1], [], []>} : vector<2x32xf32>, vector<32x96xf32>, vector<2x96xf32> -> vector<2x96xf32>
    %237 = vector.broadcast %185 : vector<1x96xf32> to vector<2x96xf32>
    %238 = arith.addf %236, %237 : vector<2x96xf32>
    %239 = vector.extract_strided_slice %235 {offsets = [0, 0], sizes = [2, 64], strides = [1, 1]} : vector<2x96xf32> to vector<2x64xf32>
    %240 = vector.extract_strided_slice %238 {offsets = [0, 0], sizes = [2, 64], strides = [1, 1]} : vector<2x96xf32> to vector<2x64xf32>
    %241 = arith.addf %239, %240 : vector<2x64xf32>
    %242 = arith.negf %241 : vector<2x64xf32>
    %243 = math.exp %242 : vector<2x64xf32>
    %cst_44 = arith.constant 1.000000e+00 : f32
    %244 = vector.broadcast %cst_44 : f32 to vector<2x64xf32>
    %245 = arith.addf %244, %243 : vector<2x64xf32>
    %246 = arith.divf %244, %245 : vector<2x64xf32>
    %247 = vector.extract_strided_slice %235 {offsets = [0, 64], sizes = [2, 32], strides = [1, 1]} : vector<2x96xf32> to vector<2x32xf32>
    %248 = vector.extract_strided_slice %246 {offsets = [0, 0], sizes = [2, 32], strides = [1, 1]} : vector<2x64xf32> to vector<2x32xf32>
    %249 = vector.extract_strided_slice %238 {offsets = [0, 64], sizes = [2, 32], strides = [1, 1]} : vector<2x96xf32> to vector<2x32xf32>
    %250 = arith.mulf %248, %249 : vector<2x32xf32>
    %251 = arith.addf %247, %250 : vector<2x32xf32>
    %252 = math.tanh %251 : vector<2x32xf32>
    %253 = vector.extract_strided_slice %246 {offsets = [0, 32], sizes = [2, 32], strides = [1, 1]} : vector<2x64xf32> to vector<2x32xf32>
    %cst_45 = arith.constant 1.000000e+00 : f32
    %254 = vector.broadcast %cst_45 : f32 to vector<2x32xf32>
    %255 = arith.subf %254, %253 : vector<2x32xf32>
    %256 = arith.mulf %255, %252 : vector<2x32xf32>
    %257 = arith.mulf %253, %234 : vector<2x32xf32>
    %258 = arith.addf %256, %257 : vector<2x32xf32>
    %259 = vector.extract_strided_slice %183 {offsets = [6, 0], sizes = [2, 96], strides = [1, 1]} : vector<16x96xf32> to vector<2x96xf32>
    %cst_46 = arith.constant dense<0.000000e+00> : vector<2x96xf32>
    %260 = tpu.matmul %258, %184, %cst_46 {dimension_numbers = #tpu.dot_dimension_numbers<[1], [0], [0], [1], [0, 0, 1, 1], [], []>} : vector<2x32xf32>, vector<32x96xf32>, vector<2x96xf32> -> vector<2x96xf32>
    %261 = vector.broadcast %185 : vector<1x96xf32> to vector<2x96xf32>
    %262 = arith.addf %260, %261 : vector<2x96xf32>
    %263 = vector.extract_strided_slice %259 {offsets = [0, 0], sizes = [2, 64], strides = [1, 1]} : vector<2x96xf32> to vector<2x64xf32>
    %264 = vector.extract_strided_slice %262 {offsets = [0, 0], sizes = [2, 64], strides = [1, 1]} : vector<2x96xf32> to vector<2x64xf32>
    %265 = arith.addf %263, %264 : vector<2x64xf32>
    %266 = arith.negf %265 : vector<2x64xf32>
    %267 = math.exp %266 : vector<2x64xf32>
    %cst_47 = arith.constant 1.000000e+00 : f32
    %268 = vector.broadcast %cst_47 : f32 to vector<2x64xf32>
    %269 = arith.addf %268, %267 : vector<2x64xf32>
    %270 = arith.divf %268, %269 : vector<2x64xf32>
    %271 = vector.extract_strided_slice %259 {offsets = [0, 64], sizes = [2, 32], strides = [1, 1]} : vector<2x96xf32> to vector<2x32xf32>
    %272 = vector.extract_strided_slice %270 {offsets = [0, 0], sizes = [2, 32], strides = [1, 1]} : vector<2x64xf32> to vector<2x32xf32>
    %273 = vector.extract_strided_slice %262 {offsets = [0, 64], sizes = [2, 32], strides = [1, 1]} : vector<2x96xf32> to vector<2x32xf32>
    %274 = arith.mulf %272, %273 : vector<2x32xf32>
    %275 = arith.addf %271, %274 : vector<2x32xf32>
    %276 = math.tanh %275 : vector<2x32xf32>
    %277 = vector.extract_strided_slice %270 {offsets = [0, 32], sizes = [2, 32], strides = [1, 1]} : vector<2x64xf32> to vector<2x32xf32>
    %cst_48 = arith.constant 1.000000e+00 : f32
    %278 = vector.broadcast %cst_48 : f32 to vector<2x32xf32>
    %279 = arith.subf %278, %277 : vector<2x32xf32>
    %280 = arith.mulf %279, %276 : vector<2x32xf32>
    %281 = arith.mulf %277, %258 : vector<2x32xf32>
    %282 = arith.addf %280, %281 : vector<2x32xf32>
    %283 = vector.extract_strided_slice %183 {offsets = [8, 0], sizes = [2, 96], strides = [1, 1]} : vector<16x96xf32> to vector<2x96xf32>
    %cst_49 = arith.constant dense<0.000000e+00> : vector<2x96xf32>
    %284 = tpu.matmul %282, %184, %cst_49 {dimension_numbers = #tpu.dot_dimension_numbers<[1], [0], [0], [1], [0, 0, 1, 1], [], []>} : vector<2x32xf32>, vector<32x96xf32>, vector<2x96xf32> -> vector<2x96xf32>
    %285 = vector.broadcast %185 : vector<1x96xf32> to vector<2x96xf32>
    %286 = arith.addf %284, %285 : vector<2x96xf32>
    %287 = vector.extract_strided_slice %283 {offsets = [0, 0], sizes = [2, 64], strides = [1, 1]} : vector<2x96xf32> to vector<2x64xf32>
    %288 = vector.extract_strided_slice %286 {offsets = [0, 0], sizes = [2, 64], strides = [1, 1]} : vector<2x96xf32> to vector<2x64xf32>
    %289 = arith.addf %287, %288 : vector<2x64xf32>
    %290 = arith.negf %289 : vector<2x64xf32>
    %291 = math.exp %290 : vector<2x64xf32>
    %cst_50 = arith.constant 1.000000e+00 : f32
    %292 = vector.broadcast %cst_50 : f32 to vector<2x64xf32>
    %293 = arith.addf %292, %291 : vector<2x64xf32>
    %294 = arith.divf %292, %293 : vector<2x64xf32>
    %295 = vector.extract_strided_slice %283 {offsets = [0, 64], sizes = [2, 32], strides = [1, 1]} : vector<2x96xf32> to vector<2x32xf32>
    %296 = vector.extract_strided_slice %294 {offsets = [0, 0], sizes = [2, 32], strides = [1, 1]} : vector<2x64xf32> to vector<2x32xf32>
    %297 = vector.extract_strided_slice %286 {offsets = [0, 64], sizes = [2, 32], strides = [1, 1]} : vector<2x96xf32> to vector<2x32xf32>
    %298 = arith.mulf %296, %297 : vector<2x32xf32>
    %299 = arith.addf %295, %298 : vector<2x32xf32>
    %300 = math.tanh %299 : vector<2x32xf32>
    %301 = vector.extract_strided_slice %294 {offsets = [0, 32], sizes = [2, 32], strides = [1, 1]} : vector<2x64xf32> to vector<2x32xf32>
    %cst_51 = arith.constant 1.000000e+00 : f32
    %302 = vector.broadcast %cst_51 : f32 to vector<2x32xf32>
    %303 = arith.subf %302, %301 : vector<2x32xf32>
    %304 = arith.mulf %303, %300 : vector<2x32xf32>
    %305 = arith.mulf %301, %282 : vector<2x32xf32>
    %306 = arith.addf %304, %305 : vector<2x32xf32>
    %307 = vector.extract_strided_slice %183 {offsets = [10, 0], sizes = [2, 96], strides = [1, 1]} : vector<16x96xf32> to vector<2x96xf32>
    %cst_52 = arith.constant dense<0.000000e+00> : vector<2x96xf32>
    %308 = tpu.matmul %306, %184, %cst_52 {dimension_numbers = #tpu.dot_dimension_numbers<[1], [0], [0], [1], [0, 0, 1, 1], [], []>} : vector<2x32xf32>, vector<32x96xf32>, vector<2x96xf32> -> vector<2x96xf32>
    %309 = vector.broadcast %185 : vector<1x96xf32> to vector<2x96xf32>
    %310 = arith.addf %308, %309 : vector<2x96xf32>
    %311 = vector.extract_strided_slice %307 {offsets = [0, 0], sizes = [2, 64], strides = [1, 1]} : vector<2x96xf32> to vector<2x64xf32>
    %312 = vector.extract_strided_slice %310 {offsets = [0, 0], sizes = [2, 64], strides = [1, 1]} : vector<2x96xf32> to vector<2x64xf32>
    %313 = arith.addf %311, %312 : vector<2x64xf32>
    %314 = arith.negf %313 : vector<2x64xf32>
    %315 = math.exp %314 : vector<2x64xf32>
    %cst_53 = arith.constant 1.000000e+00 : f32
    %316 = vector.broadcast %cst_53 : f32 to vector<2x64xf32>
    %317 = arith.addf %316, %315 : vector<2x64xf32>
    %318 = arith.divf %316, %317 : vector<2x64xf32>
    %319 = vector.extract_strided_slice %307 {offsets = [0, 64], sizes = [2, 32], strides = [1, 1]} : vector<2x96xf32> to vector<2x32xf32>
    %320 = vector.extract_strided_slice %318 {offsets = [0, 0], sizes = [2, 32], strides = [1, 1]} : vector<2x64xf32> to vector<2x32xf32>
    %321 = vector.extract_strided_slice %310 {offsets = [0, 64], sizes = [2, 32], strides = [1, 1]} : vector<2x96xf32> to vector<2x32xf32>
    %322 = arith.mulf %320, %321 : vector<2x32xf32>
    %323 = arith.addf %319, %322 : vector<2x32xf32>
    %324 = math.tanh %323 : vector<2x32xf32>
    %325 = vector.extract_strided_slice %318 {offsets = [0, 32], sizes = [2, 32], strides = [1, 1]} : vector<2x64xf32> to vector<2x32xf32>
    %cst_54 = arith.constant 1.000000e+00 : f32
    %326 = vector.broadcast %cst_54 : f32 to vector<2x32xf32>
    %327 = arith.subf %326, %325 : vector<2x32xf32>
    %328 = arith.mulf %327, %324 : vector<2x32xf32>
    %329 = arith.mulf %325, %306 : vector<2x32xf32>
    %330 = arith.addf %328, %329 : vector<2x32xf32>
    %331 = vector.extract_strided_slice %183 {offsets = [12, 0], sizes = [2, 96], strides = [1, 1]} : vector<16x96xf32> to vector<2x96xf32>
    %cst_55 = arith.constant dense<0.000000e+00> : vector<2x96xf32>
    %332 = tpu.matmul %330, %184, %cst_55 {dimension_numbers = #tpu.dot_dimension_numbers<[1], [0], [0], [1], [0, 0, 1, 1], [], []>} : vector<2x32xf32>, vector<32x96xf32>, vector<2x96xf32> -> vector<2x96xf32>
    %333 = vector.broadcast %185 : vector<1x96xf32> to vector<2x96xf32>
    %334 = arith.addf %332, %333 : vector<2x96xf32>
    %335 = vector.extract_strided_slice %331 {offsets = [0, 0], sizes = [2, 64], strides = [1, 1]} : vector<2x96xf32> to vector<2x64xf32>
    %336 = vector.extract_strided_slice %334 {offsets = [0, 0], sizes = [2, 64], strides = [1, 1]} : vector<2x96xf32> to vector<2x64xf32>
    %337 = arith.addf %335, %336 : vector<2x64xf32>
    %338 = arith.negf %337 : vector<2x64xf32>
    %339 = math.exp %338 : vector<2x64xf32>
    %cst_56 = arith.constant 1.000000e+00 : f32
    %340 = vector.broadcast %cst_56 : f32 to vector<2x64xf32>
    %341 = arith.addf %340, %339 : vector<2x64xf32>
    %342 = arith.divf %340, %341 : vector<2x64xf32>
    %343 = vector.extract_strided_slice %331 {offsets = [0, 64], sizes = [2, 32], strides = [1, 1]} : vector<2x96xf32> to vector<2x32xf32>
    %344 = vector.extract_strided_slice %342 {offsets = [0, 0], sizes = [2, 32], strides = [1, 1]} : vector<2x64xf32> to vector<2x32xf32>
    %345 = vector.extract_strided_slice %334 {offsets = [0, 64], sizes = [2, 32], strides = [1, 1]} : vector<2x96xf32> to vector<2x32xf32>
    %346 = arith.mulf %344, %345 : vector<2x32xf32>
    %347 = arith.addf %343, %346 : vector<2x32xf32>
    %348 = math.tanh %347 : vector<2x32xf32>
    %349 = vector.extract_strided_slice %342 {offsets = [0, 32], sizes = [2, 32], strides = [1, 1]} : vector<2x64xf32> to vector<2x32xf32>
    %cst_57 = arith.constant 1.000000e+00 : f32
    %350 = vector.broadcast %cst_57 : f32 to vector<2x32xf32>
    %351 = arith.subf %350, %349 : vector<2x32xf32>
    %352 = arith.mulf %351, %348 : vector<2x32xf32>
    %353 = arith.mulf %349, %330 : vector<2x32xf32>
    %354 = arith.addf %352, %353 : vector<2x32xf32>
    %355 = vector.extract_strided_slice %183 {offsets = [14, 0], sizes = [2, 96], strides = [1, 1]} : vector<16x96xf32> to vector<2x96xf32>
    %cst_58 = arith.constant dense<0.000000e+00> : vector<2x96xf32>
    %356 = tpu.matmul %354, %184, %cst_58 {dimension_numbers = #tpu.dot_dimension_numbers<[1], [0], [0], [1], [0, 0, 1, 1], [], []>} : vector<2x32xf32>, vector<32x96xf32>, vector<2x96xf32> -> vector<2x96xf32>
    %357 = vector.broadcast %185 : vector<1x96xf32> to vector<2x96xf32>
    %358 = arith.addf %356, %357 : vector<2x96xf32>
    %359 = vector.extract_strided_slice %355 {offsets = [0, 0], sizes = [2, 64], strides = [1, 1]} : vector<2x96xf32> to vector<2x64xf32>
    %360 = vector.extract_strided_slice %358 {offsets = [0, 0], sizes = [2, 64], strides = [1, 1]} : vector<2x96xf32> to vector<2x64xf32>
    %361 = arith.addf %359, %360 : vector<2x64xf32>
    %362 = arith.negf %361 : vector<2x64xf32>
    %363 = math.exp %362 : vector<2x64xf32>
    %cst_59 = arith.constant 1.000000e+00 : f32
    %364 = vector.broadcast %cst_59 : f32 to vector<2x64xf32>
    %365 = arith.addf %364, %363 : vector<2x64xf32>
    %366 = arith.divf %364, %365 : vector<2x64xf32>
    %367 = vector.extract_strided_slice %355 {offsets = [0, 64], sizes = [2, 32], strides = [1, 1]} : vector<2x96xf32> to vector<2x32xf32>
    %368 = vector.extract_strided_slice %366 {offsets = [0, 0], sizes = [2, 32], strides = [1, 1]} : vector<2x64xf32> to vector<2x32xf32>
    %369 = vector.extract_strided_slice %358 {offsets = [0, 64], sizes = [2, 32], strides = [1, 1]} : vector<2x96xf32> to vector<2x32xf32>
    %370 = arith.mulf %368, %369 : vector<2x32xf32>
    %371 = arith.addf %367, %370 : vector<2x32xf32>
    %372 = math.tanh %371 : vector<2x32xf32>
    %373 = vector.extract_strided_slice %366 {offsets = [0, 32], sizes = [2, 32], strides = [1, 1]} : vector<2x64xf32> to vector<2x32xf32>
    %cst_60 = arith.constant 1.000000e+00 : f32
    %374 = vector.broadcast %cst_60 : f32 to vector<2x32xf32>
    %375 = arith.subf %374, %373 : vector<2x32xf32>
    %376 = arith.mulf %375, %372 : vector<2x32xf32>
    %377 = arith.mulf %373, %354 : vector<2x32xf32>
    %378 = arith.addf %376, %377 : vector<2x32xf32>
    %379 = tpu.concatenate %210, %234, %258, %282, %306, %330, %354, %378 in 0 : vector<2x32xf32>, vector<2x32xf32>, vector<2x32xf32>, vector<2x32xf32>, vector<2x32xf32>, vector<2x32xf32>, vector<2x32xf32>, vector<2x32xf32> -> vector<16x32xf32>
    %380 = tpu.concatenate %378, %354, %330, %306, %282, %258, %234, %210 in 0 : vector<2x32xf32>, vector<2x32xf32>, vector<2x32xf32>, vector<2x32xf32>, vector<2x32xf32>, vector<2x32xf32>, vector<2x32xf32>, vector<2x32xf32> -> vector<16x32xf32>
    %381 = vector.extract_strided_slice %379 {offsets = [0, 0], sizes = [16, 16], strides = [1, 1]} : vector<16x32xf32> to vector<16x16xf32>
    %382 = vector.extract_strided_slice %380 {offsets = [0, 16], sizes = [16, 16], strides = [1, 1]} : vector<16x32xf32> to vector<16x16xf32>
    %383 = tpu.concatenate %381, %382 in 1 : vector<16x16xf32>, vector<16x16xf32> -> vector<16x32xf32>
    %c240 = arith.constant 240 : index
    %c0_61 = arith.constant 0 : index
    %384 = vector.load %arg1[%c240, %c0_61] : memref<544x128xf32, #tpu.memory_space<vmem>>, vector<25x25xf32>
    %c208 = arith.constant 208 : index
    %c0_62 = arith.constant 0 : index
    %385 = vector.load %arg1[%c208, %c0_62] : memref<544x128xf32, #tpu.memory_space<vmem>>, vector<32x25xf32>
    %cst_63 = arith.constant dense<0.000000e+00> : vector<16x25xf32>
    %386 = tpu.matmul %383, %385, %cst_63 {dimension_numbers = #tpu.dot_dimension_numbers<[1], [0], [0], [1], [0, 0, 1, 1], [], []>} : vector<16x32xf32>, vector<32x25xf32>, vector<16x25xf32> -> vector<16x25xf32>
    %cst_64 = arith.constant dense<0.000000e+00> : vector<2x25xf32>
    %387 = tpu.matmul %0, %386, %cst_64 {dimension_numbers = #tpu.dot_dimension_numbers<[1], [0], [0], [1], [0, 0, 1, 1], [], []>} : vector<2x16xf32>, vector<16x25xf32>, vector<2x25xf32> -> vector<2x25xf32>
    %cst_65 = arith.constant 2.000000e-01 : f32
    %388 = vector.broadcast %cst_65 : f32 to vector<2x25xf32>
    %389 = arith.mulf %387, %388 : vector<2x25xf32>
    %390 = arith.mulf %389, %389 : vector<2x25xf32>
    %cst_66 = arith.constant dense<0.000000e+00> : vector<2x25xf32>
    %391 = tpu.matmul %390, %384, %cst_66 {dimension_numbers = #tpu.dot_dimension_numbers<[1], [0], [0], [1], [0, 0, 1, 1], [], []>} : vector<2x25xf32>, vector<25x25xf32>, vector<2x25xf32> -> vector<2x25xf32>
    %cst_67 = arith.constant 1.000000e-07 : f32
    %392 = vector.broadcast %cst_67 : f32 to vector<2x25xf32>
    %393 = arith.addf %391, %392 : vector<2x25xf32>
    %394 = math.rsqrt %393 : vector<2x25xf32>
    %395 = arith.mulf %389, %394 : vector<2x25xf32>
    %396 = tpu.concatenate %395, %395, %395, %395, %395, %395, %395, %395 in 0 : vector<2x25xf32>, vector<2x25xf32>, vector<2x25xf32>, vector<2x25xf32>, vector<2x25xf32>, vector<2x25xf32>, vector<2x25xf32>, vector<2x25xf32> -> vector<16x25xf32>
    %397 = arith.mulf %396, %386 : vector<16x25xf32>
    %cst_68 = arith.constant dense<0.000000e+00> : vector<16x25xf32>
    %398 = tpu.matmul %397, %384, %cst_68 {dimension_numbers = #tpu.dot_dimension_numbers<[1], [0], [0], [1], [0, 0, 1, 1], [], []>} : vector<16x25xf32>, vector<25x25xf32>, vector<16x25xf32> -> vector<16x25xf32>
    %cst_69 = arith.constant dense<0xFF800000> : vector<16xf32>
    %399 = vector.multi_reduction <maximumf>, %398, %cst_69 [1] : vector<16x25xf32> to vector<16xf32>
    %400 = vector.shape_cast %399 : vector<16xf32> to vector<16x1xf32>
    %401 = vector.broadcast %400 : vector<16x1xf32> to vector<16x25xf32>
    %402 = arith.subf %398, %401 : vector<16x25xf32>
    %403 = math.exp %402 : vector<16x25xf32>
    %cst_70 = arith.constant dense<0.000000e+00> : vector<16xf32>
    %404 = vector.multi_reduction <add>, %403, %cst_70 [1] : vector<16x25xf32> to vector<16xf32>
    %405 = vector.shape_cast %404 : vector<16xf32> to vector<16x1xf32>
    %406 = tpu.reciprocal %405 {approx = true} : vector<16x1xf32> -> vector<16x1xf32>
    %cst_71 = arith.constant 5.000000e+00 : f32
    %407 = vector.broadcast %cst_71 : f32 to vector<16x1xf32>
    %408 = arith.mulf %407, %406 : vector<16x1xf32>
    %409 = vector.broadcast %408 : vector<16x1xf32> to vector<16x25xf32>
    %410 = arith.mulf %403, %409 : vector<16x25xf32>
    %411 = arith.mulf %410, %386 : vector<16x25xf32>
    %cst_72 = arith.constant dense<0.000000e+00> : vector<2x25xf32>
    %412 = tpu.matmul %0, %411, %cst_72 {dimension_numbers = #tpu.dot_dimension_numbers<[1], [0], [0], [1], [0, 0, 1, 1], [], []>} : vector<2x16xf32>, vector<16x25xf32>, vector<2x25xf32> -> vector<2x25xf32>
    %413 = arith.mulf %412, %412 : vector<2x25xf32>
    %cst_73 = arith.constant dense<0.000000e+00> : vector<2x25xf32>
    %414 = tpu.matmul %413, %384, %cst_73 {dimension_numbers = #tpu.dot_dimension_numbers<[1], [0], [0], [1], [0, 0, 1, 1], [], []>} : vector<2x25xf32>, vector<25x25xf32>, vector<2x25xf32> -> vector<2x25xf32>
    %cst_74 = arith.constant 1.000000e-07 : f32
    %415 = vector.broadcast %cst_74 : f32 to vector<2x25xf32>
    %416 = arith.addf %414, %415 : vector<2x25xf32>
    %417 = math.rsqrt %416 : vector<2x25xf32>
    %418 = arith.mulf %412, %417 : vector<2x25xf32>
    %419 = tpu.concatenate %418, %418, %418, %418, %418, %418, %418, %418 in 0 : vector<2x25xf32>, vector<2x25xf32>, vector<2x25xf32>, vector<2x25xf32>, vector<2x25xf32>, vector<2x25xf32>, vector<2x25xf32>, vector<2x25xf32> -> vector<16x25xf32>
    %420 = arith.mulf %419, %386 : vector<16x25xf32>
    %cst_75 = arith.constant dense<0.000000e+00> : vector<16x25xf32>
    %421 = tpu.matmul %420, %384, %cst_75 {dimension_numbers = #tpu.dot_dimension_numbers<[1], [0], [0], [1], [0, 0, 1, 1], [], []>} : vector<16x25xf32>, vector<25x25xf32>, vector<16x25xf32> -> vector<16x25xf32>
    %cst_76 = arith.constant dense<0xFF800000> : vector<16xf32>
    %422 = vector.multi_reduction <maximumf>, %421, %cst_76 [1] : vector<16x25xf32> to vector<16xf32>
    %423 = vector.shape_cast %422 : vector<16xf32> to vector<16x1xf32>
    %424 = vector.broadcast %423 : vector<16x1xf32> to vector<16x25xf32>
    %425 = arith.subf %421, %424 : vector<16x25xf32>
    %426 = math.exp %425 : vector<16x25xf32>
    %cst_77 = arith.constant dense<0.000000e+00> : vector<16xf32>
    %427 = vector.multi_reduction <add>, %426, %cst_77 [1] : vector<16x25xf32> to vector<16xf32>
    %428 = vector.shape_cast %427 : vector<16xf32> to vector<16x1xf32>
    %429 = tpu.reciprocal %428 {approx = true} : vector<16x1xf32> -> vector<16x1xf32>
    %cst_78 = arith.constant 5.000000e+00 : f32
    %430 = vector.broadcast %cst_78 : f32 to vector<16x1xf32>
    %431 = arith.mulf %430, %429 : vector<16x1xf32>
    %432 = vector.broadcast %431 : vector<16x1xf32> to vector<16x25xf32>
    %433 = arith.mulf %426, %432 : vector<16x25xf32>
    %434 = arith.mulf %433, %386 : vector<16x25xf32>
    %cst_79 = arith.constant dense<0.000000e+00> : vector<2x25xf32>
    %435 = tpu.matmul %0, %434, %cst_79 {dimension_numbers = #tpu.dot_dimension_numbers<[1], [0], [0], [1], [0, 0, 1, 1], [], []>} : vector<2x16xf32>, vector<16x25xf32>, vector<2x25xf32> -> vector<2x25xf32>
    %436 = arith.mulf %435, %435 : vector<2x25xf32>
    %cst_80 = arith.constant dense<0.000000e+00> : vector<2x25xf32>
    %437 = tpu.matmul %436, %384, %cst_80 {dimension_numbers = #tpu.dot_dimension_numbers<[1], [0], [0], [1], [0, 0, 1, 1], [], []>} : vector<2x25xf32>, vector<25x25xf32>, vector<2x25xf32> -> vector<2x25xf32>
    %cst_81 = arith.constant 1.000000e-07 : f32
    %438 = vector.broadcast %cst_81 : f32 to vector<2x25xf32>
    %439 = arith.addf %437, %438 : vector<2x25xf32>
    %440 = math.rsqrt %439 : vector<2x25xf32>
    %441 = arith.mulf %435, %440 : vector<2x25xf32>
    %442 = tpu.concatenate %441, %441, %441, %441, %441, %441, %441, %441 in 0 : vector<2x25xf32>, vector<2x25xf32>, vector<2x25xf32>, vector<2x25xf32>, vector<2x25xf32>, vector<2x25xf32>, vector<2x25xf32>, vector<2x25xf32> -> vector<16x25xf32>
    %443 = arith.mulf %442, %386 : vector<16x25xf32>
    %cst_82 = arith.constant dense<0.000000e+00> : vector<16x25xf32>
    %444 = tpu.matmul %443, %384, %cst_82 {dimension_numbers = #tpu.dot_dimension_numbers<[1], [0], [0], [1], [0, 0, 1, 1], [], []>} : vector<16x25xf32>, vector<25x25xf32>, vector<16x25xf32> -> vector<16x25xf32>
    %cst_83 = arith.constant dense<0xFF800000> : vector<16xf32>
    %445 = vector.multi_reduction <maximumf>, %444, %cst_83 [1] : vector<16x25xf32> to vector<16xf32>
    %446 = vector.shape_cast %445 : vector<16xf32> to vector<16x1xf32>
    %447 = vector.broadcast %446 : vector<16x1xf32> to vector<16x25xf32>
    %448 = arith.subf %444, %447 : vector<16x25xf32>
    %449 = math.exp %448 : vector<16x25xf32>
    %cst_84 = arith.constant dense<0.000000e+00> : vector<16xf32>
    %450 = vector.multi_reduction <add>, %449, %cst_84 [1] : vector<16x25xf32> to vector<16xf32>
    %451 = vector.shape_cast %450 : vector<16xf32> to vector<16x1xf32>
    %452 = tpu.reciprocal %451 {approx = true} : vector<16x1xf32> -> vector<16x1xf32>
    %cst_85 = arith.constant 5.000000e+00 : f32
    %453 = vector.broadcast %cst_85 : f32 to vector<16x1xf32>
    %454 = arith.mulf %453, %452 : vector<16x1xf32>
    %455 = vector.broadcast %454 : vector<16x1xf32> to vector<16x25xf32>
    %456 = arith.mulf %449, %455 : vector<16x25xf32>
    %457 = arith.mulf %456, %386 : vector<16x25xf32>
    %cst_86 = arith.constant dense<0.000000e+00> : vector<2x25xf32>
    %458 = tpu.matmul %0, %457, %cst_86 {dimension_numbers = #tpu.dot_dimension_numbers<[1], [0], [0], [1], [0, 0, 1, 1], [], []>} : vector<2x16xf32>, vector<16x25xf32>, vector<2x25xf32> -> vector<2x25xf32>
    %459 = arith.mulf %458, %458 : vector<2x25xf32>
    %cst_87 = arith.constant dense<0.000000e+00> : vector<2x25xf32>
    %460 = tpu.matmul %459, %384, %cst_87 {dimension_numbers = #tpu.dot_dimension_numbers<[1], [0], [0], [1], [0, 0, 1, 1], [], []>} : vector<2x25xf32>, vector<25x25xf32>, vector<2x25xf32> -> vector<2x25xf32>
    %cst_88 = arith.constant 1.000000e-07 : f32
    %461 = vector.broadcast %cst_88 : f32 to vector<2x25xf32>
    %462 = arith.addf %460, %461 : vector<2x25xf32>
    %463 = math.rsqrt %462 : vector<2x25xf32>
    %464 = arith.mulf %458, %463 : vector<2x25xf32>
    %c536 = arith.constant 536 : index
    %c0_89 = arith.constant 0 : index
    %465 = vector.load %arg1[%c536, %c0_89] : memref<544x128xf32, #tpu.memory_space<vmem>>, vector<1x4xf32>
    %c272 = arith.constant 272 : index
    %c0_90 = arith.constant 0 : index
    %466 = vector.load %arg1[%c272, %c0_90] : memref<544x128xf32, #tpu.memory_space<vmem>>, vector<1x25xf32>
    %467 = vector.broadcast %466 : vector<1x25xf32> to vector<2x25xf32>
    %468 = arith.mulf %464, %467 : vector<2x25xf32>
    %cst_91 = arith.constant dense<0.000000e+00> : vector<2xf32>
    %469 = vector.multi_reduction <add>, %468, %cst_91 [1] : vector<2x25xf32> to vector<2xf32>
    %470 = vector.shape_cast %469 : vector<2xf32> to vector<2x1xf32>
    %471 = vector.extract_strided_slice %465 {offsets = [0, 0], sizes = [1, 1], strides = [1, 1]} : vector<1x4xf32> to vector<1x1xf32>
    %472 = vector.broadcast %471 : vector<1x1xf32> to vector<2x1xf32>
    %473 = arith.addf %470, %472 : vector<2x1xf32>
    %cst_92 = arith.constant 0.000000e+00 : f32
    %474 = vector.broadcast %cst_92 : f32 to vector<2x1xf32>
    %475 = arith.maximumf %473, %474 : vector<2x1xf32>
    %476 = tpu.concatenate %171, %383 in 1 : vector<16x32xf32>, vector<16x32xf32> -> vector<16x64xf32>
    %c280 = arith.constant 280 : index
    %c0_93 = arith.constant 0 : index
    %477 = vector.load %arg1[%c280, %c0_93] : memref<544x128xf32, #tpu.memory_space<vmem>>, vector<64x2xf32>
    %cst_94 = arith.constant dense<0.000000e+00> : vector<16x2xf32>
    %478 = tpu.matmul %476, %477, %cst_94 {dimension_numbers = #tpu.dot_dimension_numbers<[1], [0], [0], [1], [0, 0, 1, 1], [], []>} : vector<16x64xf32>, vector<64x2xf32>, vector<16x2xf32> -> vector<16x2xf32>
    %c344 = arith.constant 344 : index
    %c0_95 = arith.constant 0 : index
    %479 = vector.load %arg1[%c344, %c0_95] : memref<544x128xf32, #tpu.memory_space<vmem>>, vector<16x2xf32>
    %480 = arith.addf %478, %479 : vector<16x2xf32>
    %481 = math.tanh %480 : vector<16x2xf32>
    %482 = math.exp %481 : vector<16x2xf32>
    %cst_96 = arith.constant dense<0.000000e+00> : vector<2x2xf32>
    %483 = tpu.matmul %0, %482, %cst_96 {dimension_numbers = #tpu.dot_dimension_numbers<[1], [0], [0], [1], [0, 0, 1, 1], [], []>} : vector<2x16xf32>, vector<16x2xf32>, vector<2x2xf32> -> vector<2x2xf32>
    %cst_97 = arith.constant 1.000000e-07 : f32
    %484 = vector.broadcast %cst_97 : f32 to vector<2x2xf32>
    %485 = arith.addf %483, %484 : vector<2x2xf32>
    %486 = tpu.reciprocal %485 {approx = true} : vector<2x2xf32> -> vector<2x2xf32>
    %487 = vector.extract_strided_slice %482 {offsets = [0, 0], sizes = [16, 1], strides = [1, 1]} : vector<16x2xf32> to vector<16x1xf32>
    %488 = vector.broadcast %487 : vector<16x1xf32> to vector<16x32xf32>
    %489 = arith.mulf %488, %171 : vector<16x32xf32>
    %cst_98 = arith.constant dense<0.000000e+00> : vector<2x32xf32>
    %490 = tpu.matmul %0, %489, %cst_98 {dimension_numbers = #tpu.dot_dimension_numbers<[1], [0], [0], [1], [0, 0, 1, 1], [], []>} : vector<2x16xf32>, vector<16x32xf32>, vector<2x32xf32> -> vector<2x32xf32>
    %491 = vector.extract_strided_slice %486 {offsets = [0, 0], sizes = [2, 1], strides = [1, 1]} : vector<2x2xf32> to vector<2x1xf32>
    %492 = vector.broadcast %491 : vector<2x1xf32> to vector<2x32xf32>
    %493 = arith.mulf %490, %492 : vector<2x32xf32>
    %494 = vector.extract_strided_slice %482 {offsets = [0, 1], sizes = [16, 1], strides = [1, 1]} : vector<16x2xf32> to vector<16x1xf32>
    %495 = vector.broadcast %494 : vector<16x1xf32> to vector<16x32xf32>
    %496 = arith.mulf %495, %383 : vector<16x32xf32>
    %cst_99 = arith.constant dense<0.000000e+00> : vector<2x32xf32>
    %497 = tpu.matmul %0, %496, %cst_99 {dimension_numbers = #tpu.dot_dimension_numbers<[1], [0], [0], [1], [0, 0, 1, 1], [], []>} : vector<2x16xf32>, vector<16x32xf32>, vector<2x32xf32> -> vector<2x32xf32>
    %498 = vector.extract_strided_slice %486 {offsets = [0, 1], sizes = [2, 1], strides = [1, 1]} : vector<2x2xf32> to vector<2x1xf32>
    %499 = vector.broadcast %498 : vector<2x1xf32> to vector<2x32xf32>
    %500 = arith.mulf %497, %499 : vector<2x32xf32>
    %501 = arith.addf %210, %234 : vector<2x32xf32>
    %502 = arith.addf %258, %282 : vector<2x32xf32>
    %503 = arith.addf %306, %330 : vector<2x32xf32>
    %504 = arith.addf %354, %378 : vector<2x32xf32>
    %505 = arith.addf %501, %502 : vector<2x32xf32>
    %506 = arith.addf %503, %504 : vector<2x32xf32>
    %507 = arith.addf %505, %506 : vector<2x32xf32>
    %cst_100 = arith.constant 1.250000e-01 : f32
    %508 = vector.broadcast %cst_100 : f32 to vector<2x32xf32>
    %509 = arith.mulf %507, %508 : vector<2x32xf32>
    %510 = arith.maximumf %210, %234 : vector<2x32xf32>
    %511 = arith.maximumf %258, %282 : vector<2x32xf32>
    %512 = arith.maximumf %306, %330 : vector<2x32xf32>
    %513 = arith.maximumf %354, %378 : vector<2x32xf32>
    %514 = arith.maximumf %510, %511 : vector<2x32xf32>
    %515 = arith.maximumf %512, %513 : vector<2x32xf32>
    %516 = arith.maximumf %514, %515 : vector<2x32xf32>
    %517 = tpu.concatenate %493, %500, %509, %516 in 1 : vector<2x32xf32>, vector<2x32xf32>, vector<2x32xf32>, vector<2x32xf32> -> vector<2x128xf32>
    %cst_101 = arith.constant dense<0.000000e+00> : vector<2xf32>
    %518 = vector.multi_reduction <add>, %517, %cst_101 [1] : vector<2x128xf32> to vector<2xf32>
    %519 = vector.shape_cast %518 : vector<2xf32> to vector<2x1xf32>
    %520 = arith.addf %519, %475 : vector<2x1xf32>
    %cst_102 = arith.constant 0.00775193795 : f32
    %521 = vector.broadcast %cst_102 : f32 to vector<2x1xf32>
    %522 = arith.mulf %520, %521 : vector<2x1xf32>
    %523 = vector.broadcast %522 : vector<2x1xf32> to vector<2x128xf32>
    %524 = arith.subf %517, %523 : vector<2x128xf32>
    %525 = arith.subf %475, %522 : vector<2x1xf32>
    %526 = arith.mulf %524, %524 : vector<2x128xf32>
    %cst_103 = arith.constant dense<0.000000e+00> : vector<2xf32>
    %527 = vector.multi_reduction <add>, %526, %cst_103 [1] : vector<2x128xf32> to vector<2xf32>
    %528 = vector.shape_cast %527 : vector<2xf32> to vector<2x1xf32>
    %529 = arith.mulf %525, %525 : vector<2x1xf32>
    %530 = arith.addf %528, %529 : vector<2x1xf32>
    %cst_104 = arith.constant 0.00775193795 : f32
    %531 = vector.broadcast %cst_104 : f32 to vector<2x1xf32>
    %532 = arith.mulf %530, %531 : vector<2x1xf32>
    %cst_105 = arith.constant 9.99999974E-6 : f32
    %533 = vector.broadcast %cst_105 : f32 to vector<2x1xf32>
    %534 = arith.addf %532, %533 : vector<2x1xf32>
    %535 = math.rsqrt %534 : vector<2x1xf32>
    %536 = vector.broadcast %535 : vector<2x1xf32> to vector<2x128xf32>
    %537 = arith.mulf %524, %536 : vector<2x128xf32>
    %c360 = arith.constant 360 : index
    %c0_106 = arith.constant 0 : index
    %538 = vector.load %arg1[%c360, %c0_106] : memref<544x128xf32, #tpu.memory_space<vmem>>, vector<1x128xf32>
    %539 = vector.broadcast %538 : vector<1x128xf32> to vector<2x128xf32>
    %540 = arith.mulf %537, %539 : vector<2x128xf32>
    %c368 = arith.constant 368 : index
    %c0_107 = arith.constant 0 : index
    %541 = vector.load %arg1[%c368, %c0_107] : memref<544x128xf32, #tpu.memory_space<vmem>>, vector<1x128xf32>
    %542 = vector.broadcast %541 : vector<1x128xf32> to vector<2x128xf32>
    %543 = arith.addf %540, %542 : vector<2x128xf32>
    %cst_108 = arith.constant 0.000000e+00 : f32
    %544 = vector.broadcast %cst_108 : f32 to vector<2x128xf32>
    %545 = arith.maximumf %543, %544 : vector<2x128xf32>
    %546 = arith.mulf %525, %535 : vector<2x1xf32>
    %547 = vector.extract_strided_slice %465 {offsets = [0, 1], sizes = [1, 1], strides = [1, 1]} : vector<1x4xf32> to vector<1x1xf32>
    %548 = vector.broadcast %547 : vector<1x1xf32> to vector<2x1xf32>
    %549 = arith.mulf %546, %548 : vector<2x1xf32>
    %550 = vector.extract_strided_slice %465 {offsets = [0, 2], sizes = [1, 1], strides = [1, 1]} : vector<1x4xf32> to vector<1x1xf32>
    %551 = vector.broadcast %550 : vector<1x1xf32> to vector<2x1xf32>
    %552 = arith.addf %549, %551 : vector<2x1xf32>
    %cst_109 = arith.constant 0.000000e+00 : f32
    %553 = vector.broadcast %cst_109 : f32 to vector<2x1xf32>
    %554 = arith.maximumf %552, %553 : vector<2x1xf32>
    %c376 = arith.constant 376 : index
    %c0_110 = arith.constant 0 : index
    %555 = vector.load %arg1[%c376, %c0_110] : memref<544x128xf32, #tpu.memory_space<vmem>>, vector<128x16xf32>
    %cst_111 = arith.constant dense<0.000000e+00> : vector<2x16xf32>
    %556 = tpu.matmul %545, %555, %cst_111 {dimension_numbers = #tpu.dot_dimension_numbers<[1], [0], [0], [1], [0, 0, 1, 1], [], []>} : vector<2x128xf32>, vector<128x16xf32>, vector<2x16xf32> -> vector<2x16xf32>
    %c504 = arith.constant 504 : index
    %c0_112 = arith.constant 0 : index
    %557 = vector.load %arg1[%c504, %c0_112] : memref<544x128xf32, #tpu.memory_space<vmem>>, vector<1x16xf32>
    %558 = vector.broadcast %554 : vector<2x1xf32> to vector<2x16xf32>
    %559 = vector.broadcast %557 : vector<1x16xf32> to vector<2x16xf32>
    %560 = arith.mulf %558, %559 : vector<2x16xf32>
    %561 = arith.addf %556, %560 : vector<2x16xf32>
    %c512 = arith.constant 512 : index
    %c0_113 = arith.constant 0 : index
    %562 = vector.load %arg1[%c512, %c0_113] : memref<544x128xf32, #tpu.memory_space<vmem>>, vector<1x16xf32>
    %563 = vector.broadcast %562 : vector<1x16xf32> to vector<2x16xf32>
    %564 = arith.addf %561, %563 : vector<2x16xf32>
    %c520 = arith.constant 520 : index
    %c0_114 = arith.constant 0 : index
    %565 = vector.load %arg1[%c520, %c0_114] : memref<544x128xf32, #tpu.memory_space<vmem>>, vector<1x16xf32>
    %566 = vector.broadcast %565 : vector<1x16xf32> to vector<2x16xf32>
    %567 = arith.mulf %564, %566 : vector<2x16xf32>
    %cst_115 = arith.constant dense<0.000000e+00> : vector<2xf32>
    %568 = vector.multi_reduction <add>, %567, %cst_115 [1] : vector<2x16xf32> to vector<2xf32>
    %569 = vector.shape_cast %568 : vector<2xf32> to vector<2x1xf32>
    %570 = vector.extract_strided_slice %465 {offsets = [0, 3], sizes = [1, 1], strides = [1, 1]} : vector<1x4xf32> to vector<1x1xf32>
    %571 = vector.broadcast %570 : vector<1x1xf32> to vector<2x1xf32>
    %572 = arith.addf %569, %571 : vector<2x1xf32>
    %c0_116 = arith.constant 0 : index
    %c0_117 = arith.constant 0 : index
    %573 = vector.load %arg2[%c0_116, %c0_117] : memref<2x1xf32, #tpu.memory_space<vmem>>, vector<2x1xf32>
    tpu.vector_store %arg2[%c0_116, %c0_117], %572 {strides = array<i32>} : memref<2x1xf32, #tpu.memory_space<vmem>>, vector<2x1xf32>,
    return
  }
}

</mosaic_0001>

<llo_original>
// kernel: toxic_forward.1
$region0: #{toxic_forward.1}
  #allocation0 [shape = 'u32[]', space=smem, size = 0x4, offset = 0x4, fixed_abs, tag = 'smem constant byte address 0x4 - core index']
  #allocation1 [shape = 'u32[72,128]{1,0:T(1,128)}', space=vmem, size = 0x9000, scoped, tag = 'internal scratch']
  %s0 = inlined_call_operand.vmem [shape: s32[16,1], index: 0, kind: input, shape index: {}]
  %s1 = inlined_call_operand.hbm [shape: f32[544,128], index: 1, kind: input, shape index: {}]
  %s2 = inlined_call_operand.vmem [shape: f32[2,1], index: 2, kind: output, shape index: {}]
  %s3 = sld [smem:[#allocation0]]
  $region22: #{toxic_forward.1} parent=0
    _
  %s5 = ssub.s32 1, %s3
  %s6 = scalar_select 0, %s5, %s3
  $region1: #{toxic_forward.1} parent=0
    #allocation2 [shape = 'u8[278528]{0}', space=vmem, size = 0x44000, scoped, tag = 'input window, operand 1, single buffered']
    #allocation3 [shape = 's32[1]{0}', space=sflag, size = 0x4, scoped, tag = 'scoped memory for toxic_forward.1']
    %7 = vsyncpa [#allocation3], 0
    // Predicated region
    $region2: #{toxic_forward.1} parent=1 // pred_check
      _
    $region3: #{toxic_forward.1} parent=1 // pred_check_branch
      %9 = sbr.rel (0) target = $region5
    $region4: #{toxic_forward.1} parent=1 // pred_region
      _
    $region5: #{toxic_forward.1} parent=1 // pred_fallthru
      _
    // Predicated region
    $region6: #{toxic_forward.1} parent=1 // pred_check
      _
    $region7: #{toxic_forward.1} parent=1 // pred_check_branch
      %11 = sbr.rel (0) target = $region9
    $region8: #{toxic_forward.1} parent=1 // pred_region
      %13 = vsyncadd [#allocation3], 0
      %s14 = sshll.u32 %s1, 4
      %s15 = int_to_ptr.hbm [resolvable:$true] %s14
      %s16 = sshll.u32 [#allocation2], 4
      %s17 = int_to_ptr.vmem [resolvable:$true] %s16
      %22 = dma.hbm_to_vmem [thread:$0]  %s15, 8704, %s17, [#allocation3], 128, 128, 8
    $region9: #{toxic_forward.1} parent=1 // pred_fallthru
      _
    // Predicated region
    $region10: #{toxic_forward.1} parent=1 // pred_check
      _
    $region11: #{toxic_forward.1} parent=1 // pred_check_branch
      %24 = sbr.rel (0) target = $region13
    $region12: #{toxic_forward.1} parent=1 // pred_region
      %26 = dma.done [#allocation3], 8704
    $region13: #{toxic_forward.1} parent=1 // pred_fallthru
      _
    %v27 = vld [vmem:[#allocation2 + $0x210] sm:$0x3]
    %v28 = vld [vmem:[#allocation2 + $0x68] sm:$0xff]
    %v29 = vld [vmem:[#allocation2 + $0x70] sm:$0xff]
    %v30 = vlaneseq
    %v31 = vand.u32 %v30, 127
    %v32 = vld [vmem:[%s0] sm:$0xff]
    %v33 = vld [vmem:[%s0 + $0x8] sm:$0xff]
    %34 = vset.pattern.permute.xlu0 0
    %35 = vperm.xlu0 %34, %v32
    %v36 = vpop.permute.xlu0 %35
    %37 = vset.pattern.permute.xlu0 0
    %38 = vperm.xlu0 %37, %v33
    %v39 = vpop.permute.xlu0 %38
    %vm40 = vcmp.eq.s32.totalorder %v31, %v36
    %vm41 = vcmp.eq.s32.totalorder %v31, %v39
    %v42 = vsel %vm40, 1, 0
    %v43 = vsel %vm41, 1, 0
    %v44 = vcvt.s32.f32 %v42
    %v45 = vcvt.s32.f32 %v43
    %v46 = vld [vmem:[#allocation2] sm:$0xff]
    %v47 = vld [vmem:[#allocation2 + $0x8] sm:$0xff]
    %v48 = vld [vmem:[#allocation2 + $0x10] sm:$0xff]
    %v49 = vld [vmem:[#allocation2 + $0x18] sm:$0xff]
    %v50 = vld [vmem:[#allocation2 + $0x20] sm:$0xff]
    %v51 = vld [vmem:[#allocation2 + $0x28] sm:$0xff]
    %v52 = vld [vmem:[#allocation2 + $0x30] sm:$0x3]
    %v53 = vld [vmem:[#allocation2 + $0x38] sm:$0x1]
    %v54 = vperm.slane %v53, 0
    %vm55 = vcmask 408576
    %v57 = vsel %vm55, %v44, 0
    %v60 = vsel %vm55, %v45, 0
    %vm62 = vcmask 1041408
    %v64 = vsel %vm62, %v52, 0
    %66 = vmatpush.msra.mxu0 0.0
    %67 = vmatpush.msra.mxu0 0.0
    %68 = vmatpush.msra.mxu0 0.0
    %69 = vmatpush.msra.mxu0 0.0
    %70 = vmatpush.msra.mxu0 0.0
    %71 = vmatpush.msra.mxu0 0.0
    %72 = vmatpush.msra.mxu0 0.0
    %73 = vmatpush.msra.mxu0 0.0
    %74 = vmatpush.msra.mxu0 0.0
    %75 = vmatpush.msra.mxu0 %v64
    %76 = vmatpush.msra.mxu0 %v51
    %77 = vmatpush.msra.mxu0 %v50
    %78 = vmatpush.msra.mxu0 %v49
    %79 = vmatpush.msra.mxu0 %v48
    %80 = vmatpush.msra.mxu0 %v47
    %81 = vmatpush.msra.mxu0 %v46
    %82 = vmatmul.f32.gmra.mxu0 %v57
    %v83 = vpop.f32.mrf.mxu0
    %v84 = vadd.f32 %v54, %v83
    %85 = vmatmul.f32.gmra.mxu0 %v60
    %v86 = vpop.f32.mrf.mxu0
    %v87 = vadd.f32 %v54, %v86
    %88 = vdwg.mxu0
    %v89 = vld [vmem:[#allocation2 + $0x60] sm:$0x1]
    %vm90 = vcmp.gt.f32.partialorder %v89, 0.5
    %vm91 = vcmask 130048
    %v93 = vsel %vm91, %v28, 0
    %v96 = vsel %vm91, %v29, 0
    %98 = vmatpush.msra.mxu0 0.0
    %99 = vmatpush.msra.mxu0 0.0
    %100 = vmatpush.msra.mxu0 0.0
    %101 = vmatpush.msra.mxu0 0.0
    %102 = vmatpush.msra.mxu0 0.0
    %103 = vmatpush.msra.mxu0 0.0
    %104 = vmatpush.msra.mxu0 0.0
    %105 = vmatpush.msra.mxu0 0.0
    %106 = vmatpush.msra.mxu0 0.0
    %107 = vmatpush.msra.mxu0 0.0
    %108 = vmatpush.msra.mxu0 0.0
    %109 = vmatpush.msra.mxu0 0.0
    %110 = vmatpush.msra.mxu0 0.0
    %111 = vmatpush.msra.mxu0 0.0
    %112 = vmatpush.msra.mxu0 %v87
    %113 = vmatpush.msra.mxu0 %v84
    %114 = vmatmul.f32.gmra.mxu0 %v93
    %v115 = vpop.f32.mrf.mxu0
    %v116 = vadd.f32 0.0, %v115
    %117 = vmatmul.f32.gmra.mxu0 %v96
    %v118 = vpop.f32.mrf.mxu0
    %v119 = vadd.f32 0.0, %v118
    %120 = vdwg.mxu0
    %v121 = vsel %vm90, 1, 0
    %v122 = vperm.slane %v121, 0
    %vm123 = vcmp.eq.s32.totalorder %v122, 1
    %v124 = vsel %vm123, %v84, %v116
    %v125 = vsel %vm123, %v87, %v119
    %v126 = vld [vmem:[#allocation2 + $0x40] sm:$0xff]
    %v127 = vld [vmem:[#allocation2 + $0x48] sm:$0xff]
    %v128 = vld [vmem:[#allocation2 + $0x50] sm:$0xff]
    %v129 = vld [vmem:[#allocation2 + $0x58] sm:$0xff]
    %vm130 = vcmask 261120
    %v132 = vsel %vm130, 0.0, 0
    %134 = vmatpush.msra.mxu0 0.0
    %135 = vmatpush.msra.mxu0 0.0
    %136 = vmatpush.msra.mxu0 0.0
    %137 = vmatpush.msra.mxu0 0.0
    %138 = vmatpush.msra.mxu0 0.0
    %139 = vmatpush.msra.mxu0 0.0
    %140 = vmatpush.msra.mxu0 0.0
    %141 = vmatpush.msra.mxu0 0.0
    %142 = vmatpush.msra.mxu0 0.0
    %143 = vmatpush.msra.mxu0 0.0
    %144 = vmatpush.msra.mxu0 0.0
    %145 = vmatpush.msra.mxu0 0.0
    %146 = vmatpush.msra.mxu0 %v129
    %147 = vmatpush.msra.mxu0 %v128
    %148 = vmatpush.msra.mxu0 %v127
    %149 = vmatpush.msra.mxu0 %v126
    %150 = vmatmul.f32.gmra.mxu0 %v132
    %v151 = vpop.f32.mrf.mxu0
    %v152 = vadd.f32 0.0, %v151
    %153 = vdwg.mxu0
    %v154 = vadd.f32 %v124, %v152
    %v155 = vxor.u32 %v154, 2147483648
    %v156 = vmul.f32 %v155, 1.442695
    %v157 = vpow.pop %v156
    %v158 = vadd.f32 %v157, 1.0
    %v159 = vrcp.pop %v158
    %v160 = vmul.f32 %v158, %v159
    %v161 = vsub.f32 1.0, %v160
    %v162 = vmul.f32 %v159, %v161
    %v163 = vadd.f32 %v159, %v162
    %vm164 = vweird.f32 %v158
    %vm165 = vweird.f32 %v159
    %vm166 = vmor %vm164, %vm165
    %v167 = vsel %vm166, %v159, %v163
    %v168 = vand.u32 2147483647, %v158
    %vm169 = vcmp.eq.f32.partialorder %v168, 8.507059e+37
    %v170 = vand.u32 %v158, 2147483648
    %v171 = vor.u32 1.1754944e-38, %v170
    %v172 = vsel %vm169, %v171, %v167
    %v173 = vmul.f32 1.0, %v172
    %v174 = vtanh.pop %v154
    %v175 = vmul.f32 %v173, 0.0
    %177 = vrot.lane.b32.xlu0 %v174, 64
    %v178 = vpop.permute.xlu0 %177
    %v180 = vmul.f32 %v173, %v178
    %182 = vrot.lane.b32.xlu0 %v180, 32
    %v183 = vpop.permute.xlu0 %182
    %v185 = vadd.f32 %v175, %v183
    %v186 = vtanh.pop %v185
    %188 = vrot.lane.b32.xlu0 %v186, 64
    %v189 = vpop.permute.xlu0 %188
    %v191 = vmul.f32 %v173, %v189
    %193 = vrot.lane.b32.xlu0 %v191, 32
    %v194 = vpop.permute.xlu0 %193
    %v195 = vsel %vm130, %v194, 0
    %197 = vmatpush.msra.mxu0 0.0
    %198 = vmatpush.msra.mxu0 0.0
    %199 = vmatpush.msra.mxu0 0.0
    %200 = vmatpush.msra.mxu0 0.0
    %201 = vmatpush.msra.mxu0 0.0
    %202 = vmatpush.msra.mxu0 0.0
    %203 = vmatpush.msra.mxu0 0.0
    %204 = vmatpush.msra.mxu0 0.0
    %205 = vmatpush.msra.mxu0 0.0
    %206 = vmatpush.msra.mxu0 0.0
    %207 = vmatpush.msra.mxu0 0.0
    %208 = vmatpush.msra.mxu0 0.0
    %209 = vmatpush.msra.mxu0 %v129
    %210 = vmatpush.msra.mxu0 %v128
    %211 = vmatpush.msra.mxu0 %v127
    %212 = vmatpush.msra.mxu0 %v126
    %213 = vmatmul.f32.gmra.mxu0 %v195
    %v214 = vpop.f32.mrf.mxu0
    %v215 = vadd.f32 0.0, %v214
    %216 = vdwg.mxu0
    %v218 = vrot.slane %v215, 6
    %v220 = vadd.f32 %v124, %v218
    %v221 = vxor.u32 %v220, 2147483648
    %v222 = vmul.f32 %v221, 1.442695
    %v223 = vpow.pop %v222
    %v224 = vadd.f32 %v223, 1.0
    %v225 = vrcp.pop %v224
    %v226 = vmul.f32 %v224, %v225
    %v227 = vsub.f32 1.0, %v226
    %v228 = vmul.f32 %v225, %v227
    %v229 = vadd.f32 %v225, %v228
    %vm230 = vweird.f32 %v224
    %vm231 = vweird.f32 %v225
    %vm232 = vmor %vm230, %vm231
    %v233 = vsel %vm232, %v225, %v229
    %v234 = vand.u32 2147483647, %v224
    %vm235 = vcmp.eq.f32.partialorder %v234, 8.507059e+37
    %v236 = vand.u32 %v224, 2147483648
    %v237 = vor.u32 1.1754944e-38, %v236
    %v238 = vsel %vm235, %v237, %v233
    %v239 = vmul.f32 1.0, %v238
    %v240 = vtanh.pop %v220
    %v242 = vrot.slane %v185, 6
    %v244 = vmul.f32 %v239, %v242
    %246 = vrot.lane.b32.xlu0 %v240, 64
    %v247 = vpop.permute.xlu0 %246
    %v249 = vmul.f32 %v239, %v247
    %251 = vrot.lane.b32.xlu0 %v249, 32
    %v252 = vpop.permute.xlu0 %251
    %v254 = vadd.f32 %v244, %v252
    %v255 = vtanh.pop %v254
    %257 = vrot.lane.b32.xlu0 %v255, 64
    %v258 = vpop.permute.xlu0 %257
    %v260 = vmul.f32 %v239, %v258
    %v262 = vrot.slane %v260, 2
    %263 = vrot.lane.b32.xlu0 %v262, 32
    %v264 = vpop.permute.xlu0 %263
    %v265 = vsel %vm130, %v264, 0
    %267 = vmatpush.msra.mxu0 0.0
    %268 = vmatpush.msra.mxu0 0.0
    %269 = vmatpush.msra.mxu0 0.0
    %270 = vmatpush.msra.mxu0 0.0
    %271 = vmatpush.msra.mxu0 0.0
    %272 = vmatpush.msra.mxu0 0.0
    %273 = vmatpush.msra.mxu0 0.0
    %274 = vmatpush.msra.mxu0 0.0
    %275 = vmatpush.msra.mxu0 0.0
    %276 = vmatpush.msra.mxu0 0.0
    %277 = vmatpush.msra.mxu0 0.0
    %278 = vmatpush.msra.mxu0 0.0
    %279 = vmatpush.msra.mxu0 %v129
    %280 = vmatpush.msra.mxu0 %v128
    %281 = vmatpush.msra.mxu0 %v127
    %282 = vmatpush.msra.mxu0 %v126
    %283 = vmatmul.f32.gmra.mxu0 %v265
    %v284 = vpop.f32.mrf.mxu0
    %v285 = vadd.f32 0.0, %v284
    %286 = vdwg.mxu0
    %v288 = vrot.slane %v285, 4
    %v290 = vadd.f32 %v124, %v288
    %v291 = vxor.u32 %v290, 2147483648
    %v292 = vmul.f32 %v291, 1.442695
    %v293 = vpow.pop %v292
    %v294 = vadd.f32 %v293, 1.0
    %v295 = vrcp.pop %v294
    %v296 = vmul.f32 %v294, %v295
    %v297 = vsub.f32 1.0, %v296
    %v298 = vmul.f32 %v295, %v297
    %v299 = vadd.f32 %v295, %v298
    %vm300 = vweird.f32 %v294
    %vm301 = vweird.f32 %v295
    %vm302 = vmor %vm300, %vm301
    %v303 = vsel %vm302, %v295, %v299
    %v304 = vand.u32 2147483647, %v294
    %vm305 = vcmp.eq.f32.partialorder %v304, 8.507059e+37
    %v306 = vand.u32 %v294, 2147483648
    %v307 = vor.u32 1.1754944e-38, %v306
    %v308 = vsel %vm305, %v307, %v303
    %v309 = vmul.f32 1.0, %v308
    %v310 = vtanh.pop %v290
    %v312 = vrot.slane %v254, 6
    %v314 = vmul.f32 %v309, %v312
    %316 = vrot.lane.b32.xlu0 %v310, 64
    %v317 = vpop.permute.xlu0 %316
    %v319 = vmul.f32 %v309, %v317
    %321 = vrot.lane.b32.xlu0 %v319, 32
    %v322 = vpop.permute.xlu0 %321
    %v324 = vadd.f32 %v314, %v322
    %v325 = vtanh.pop %v324
    %327 = vrot.lane.b32.xlu0 %v325, 64
    %v328 = vpop.permute.xlu0 %327
    %v330 = vmul.f32 %v309, %v328
    %v332 = vrot.slane %v330, 4
    %333 = vrot.lane.b32.xlu0 %v332, 32
    %v334 = vpop.permute.xlu0 %333
    %v335 = vsel %vm130, %v334, 0
    %337 = vmatpush.msra.mxu0 0.0
    %338 = vmatpush.msra.mxu0 0.0
    %339 = vmatpush.msra.mxu0 0.0
    %340 = vmatpush.msra.mxu0 0.0
    %341 = vmatpush.msra.mxu0 0.0
    %342 = vmatpush.msra.mxu0 0.0
    %343 = vmatpush.msra.mxu0 0.0
    %344 = vmatpush.msra.mxu0 0.0
    %345 = vmatpush.msra.mxu0 0.0
    %346 = vmatpush.msra.mxu0 0.0
    %347 = vmatpush.msra.mxu0 0.0
    %348 = vmatpush.msra.mxu0 0.0
    %349 = vmatpush.msra.mxu0 %v129
    %350 = vmatpush.msra.mxu0 %v128
    %351 = vmatpush.msra.mxu0 %v127
    %352 = vmatpush.msra.mxu0 %v126
    %353 = vmatmul.f32.gmra.mxu0 %v335
    %v354 = vpop.f32.mrf.mxu0
    %v355 = vadd.f32 0.0, %v354
    %356 = vdwg.mxu0
    %v358 = vrot.slane %v355, 2
    %v360 = vadd.f32 %v124, %v358
    %v361 = vxor.u32 %v360, 2147483648
    %v362 = vmul.f32 %v361, 1.442695
    %v363 = vpow.pop %v362
    %v364 = vadd.f32 %v363, 1.0
    %v365 = vrcp.pop %v364
    %v366 = vmul.f32 %v364, %v365
    %v367 = vsub.f32 1.0, %v366
    %v368 = vmul.f32 %v365, %v367
    %v369 = vadd.f32 %v365, %v368
    %vm370 = vweird.f32 %v364
    %vm371 = vweird.f32 %v365
    %vm372 = vmor %vm370, %vm371
    %v373 = vsel %vm372, %v365, %v369
    %v374 = vand.u32 2147483647, %v364
    %vm375 = vcmp.eq.f32.partialorder %v374, 8.507059e+37
    %v376 = vand.u32 %v364, 2147483648
    %v377 = vor.u32 1.1754944e-38, %v376
    %v378 = vsel %vm375, %v377, %v373
    %v379 = vmul.f32 1.0, %v378
    %v380 = vtanh.pop %v360
    %v382 = vrot.slane %v324, 6
    %v384 = vmul.f32 %v379, %v382
    %386 = vrot.lane.b32.xlu0 %v380, 64
    %v387 = vpop.permute.xlu0 %386
    %v389 = vmul.f32 %v379, %v387
    %391 = vrot.lane.b32.xlu0 %v389, 32
    %v392 = vpop.permute.xlu0 %391
    %v394 = vadd.f32 %v384, %v392
    %v395 = vtanh.pop %v394
    %397 = vrot.lane.b32.xlu0 %v395, 64
    %v398 = vpop.permute.xlu0 %397
    %v400 = vmul.f32 %v379, %v398
    %v402 = vrot.slane %v400, 6
    %403 = vrot.lane.b32.xlu0 %v402, 32
    %v404 = vpop.permute.xlu0 %403
    %v405 = vsel %vm130, %v404, 0
    %407 = vmatpush.msra.mxu0 0.0
    %408 = vmatpush.msra.mxu0 0.0
    %409 = vmatpush.msra.mxu0 0.0
    %410 = vmatpush.msra.mxu0 0.0
    %411 = vmatpush.msra.mxu0 0.0
    %412 = vmatpush.msra.mxu0 0.0
    %413 = vmatpush.msra.mxu0 0.0
    %414 = vmatpush.msra.mxu0 0.0
    %415 = vmatpush.msra.mxu0 0.0
    %416 = vmatpush.msra.mxu0 0.0
    %417 = vmatpush.msra.mxu0 0.0
    %418 = vmatpush.msra.mxu0 0.0
    %419 = vmatpush.msra.mxu0 %v129
    %420 = vmatpush.msra.mxu0 %v128
    %421 = vmatpush.msra.mxu0 %v127
    %422 = vmatpush.msra.mxu0 %v126
    %423 = vmatmul.f32.gmra.mxu0 %v405
    %v424 = vpop.f32.mrf.mxu0
    %v425 = vadd.f32 0.0, %v424
    %426 = vdwg.mxu0
    %v427 = vadd.f32 %v125, %v425
    %v428 = vxor.u32 %v427, 2147483648
    %v429 = vmul.f32 %v428, 1.442695
    %v430 = vpow.pop %v429
    %v431 = vadd.f32 %v430, 1.0
    %v432 = vrcp.pop %v431
    %v433 = vmul.f32 %v431, %v432
    %v434 = vsub.f32 1.0, %v433
    %v435 = vmul.f32 %v432, %v434
    %v436 = vadd.f32 %v432, %v435
    %vm437 = vweird.f32 %v431
    %vm438 = vweird.f32 %v432
    %vm439 = vmor %vm437, %vm438
    %v440 = vsel %vm439, %v432, %v436
    %v441 = vand.u32 2147483647, %v431
    %vm442 = vcmp.eq.f32.partialorder %v441, 8.507059e+37
    %v443 = vand.u32 %v431, 2147483648
    %v444 = vor.u32 1.1754944e-38, %v443
    %v445 = vsel %vm442, %v444, %v440
    %v446 = vmul.f32 1.0, %v445
    %v447 = vtanh.pop %v427
    %v449 = vrot.slane %v394, 6
    %v451 = vmul.f32 %v446, %v449
    %453 = vrot.lane.b32.xlu0 %v447, 64
    %v454 = vpop.permute.xlu0 %453
    %v456 = vmul.f32 %v446, %v454
    %458 = vrot.lane.b32.xlu0 %v456, 32
    %v459 = vpop.permute.xlu0 %458
    %v461 = vadd.f32 %v451, %v459
    %v462 = vtanh.pop %v461
    %464 = vrot.lane.b32.xlu0 %v462, 64
    %v465 = vpop.permute.xlu0 %464
    %v467 = vmul.f32 %v446, %v465
    %469 = vrot.lane.b32.xlu0 %v467, 32
    %v470 = vpop.permute.xlu0 %469
    %v471 = vsel %vm130, %v470, 0
    %473 = vmatpush.msra.mxu0 0.0
    %474 = vmatpush.msra.mxu0 0.0
    %475 = vmatpush.msra.mxu0 0.0
    %476 = vmatpush.msra.mxu0 0.0
    %477 = vmatpush.msra.mxu0 0.0
    %478 = vmatpush.msra.mxu0 0.0
    %479 = vmatpush.msra.mxu0 0.0
    %480 = vmatpush.msra.mxu0 0.0
    %481 = vmatpush.msra.mxu0 0.0
    %482 = vmatpush.msra.mxu0 0.0
    %483 = vmatpush.msra.mxu0 0.0
    %484 = vmatpush.msra.mxu0 0.0
    %485 = vmatpush.msra.mxu0 %v129
    %486 = vmatpush.msra.mxu0 %v128
    %487 = vmatpush.msra.mxu0 %v127
    %488 = vmatpush.msra.mxu0 %v126
    %489 = vmatmul.f32.gmra.mxu0 %v471
    %v490 = vpop.f32.mrf.mxu0
    %v491 = vadd.f32 0.0, %v490
    %492 = vdwg.mxu0
    %v494 = vrot.slane %v491, 6
    %v496 = vadd.f32 %v125, %v494
    %v497 = vxor.u32 %v496, 2147483648
    %v498 = vmul.f32 %v497, 1.442695
    %v499 = vpow.pop %v498
    %v500 = vadd.f32 %v499, 1.0
    %v501 = vrcp.pop %v500
    %v502 = vmul.f32 %v500, %v501
    %v503 = vsub.f32 1.0, %v502
    %v504 = vmul.f32 %v501, %v503
    %v505 = vadd.f32 %v501, %v504
    %vm506 = vweird.f32 %v500
    %vm507 = vweird.f32 %v501
    %vm508 = vmor %vm506, %vm507
    %v509 = vsel %vm508, %v501, %v505
    %v510 = vand.u32 2147483647, %v500
    %vm511 = vcmp.eq.f32.partialorder %v510, 8.507059e+37
    %v512 = vand.u32 %v500, 2147483648
    %v513 = vor.u32 1.1754944e-38, %v512
    %v514 = vsel %vm511, %v513, %v509
    %v515 = vmul.f32 1.0, %v514
    %v516 = vtanh.pop %v496
    %v518 = vrot.slane %v461, 6
    %v520 = vmul.f32 %v515, %v518
    %522 = vrot.lane.b32.xlu0 %v516, 64
    %v523 = vpop.permute.xlu0 %522
    %v525 = vmul.f32 %v515, %v523
    %527 = vrot.lane.b32.xlu0 %v525, 32
    %v528 = vpop.permute.xlu0 %527
    %v530 = vadd.f32 %v520, %v528
    %v531 = vtanh.pop %v530
    %533 = vrot.lane.b32.xlu0 %v531, 64
    %v534 = vpop.permute.xlu0 %533
    %v536 = vmul.f32 %v515, %v534
    %v538 = vrot.slane %v536, 2
    %539 = vrot.lane.b32.xlu0 %v538, 32
    %v540 = vpop.permute.xlu0 %539
    %v541 = vsel %vm130, %v540, 0
    %543 = vmatpush.msra.mxu0 0.0
    %544 = vmatpush.msra.mxu0 0.0
    %545 = vmatpush.msra.mxu0 0.0
    %546 = vmatpush.msra.mxu0 0.0
    %547 = vmatpush.msra.mxu0 0.0
    %548 = vmatpush.msra.mxu0 0.0
    %549 = vmatpush.msra.mxu0 0.0
    %550 = vmatpush.msra.mxu0 0.0
    %551 = vmatpush.msra.mxu0 0.0
    %552 = vmatpush.msra.mxu0 0.0
    %553 = vmatpush.msra.mxu0 0.0
    %554 = vmatpush.msra.mxu0 0.0
    %555 = vmatpush.msra.mxu0 %v129
    %556 = vmatpush.msra.mxu0 %v128
    %557 = vmatpush.msra.mxu0 %v127
    %558 = vmatpush.msra.mxu0 %v126
    %559 = vmatmul.f32.gmra.mxu0 %v541
    %v560 = vpop.f32.mrf.mxu0
    %v561 = vadd.f32 0.0, %v560
    %562 = vdwg.mxu0
    %v564 = vrot.slane %v561, 4
    %v566 = vadd.f32 %v125, %v564
    %v567 = vxor.u32 %v566, 2147483648
    %v568 = vmul.f32 %v567, 1.442695
    %v569 = vpow.pop %v568
    %v570 = vadd.f32 %v569, 1.0
    %v571 = vrcp.pop %v570
    %v572 = vmul.f32 %v570, %v571
    %v573 = vsub.f32 1.0, %v572
    %v574 = vmul.f32 %v571, %v573
    %v575 = vadd.f32 %v571, %v574
    %vm576 = vweird.f32 %v570
    %vm577 = vweird.f32 %v571
    %vm578 = vmor %vm576, %vm577
    %v579 = vsel %vm578, %v571, %v575
    %v580 = vand.u32 2147483647, %v570
    %vm581 = vcmp.eq.f32.partialorder %v580, 8.507059e+37
    %v582 = vand.u32 %v570, 2147483648
    %v583 = vor.u32 1.1754944e-38, %v582
    %v584 = vsel %vm581, %v583, %v579
    %v585 = vmul.f32 1.0, %v584
    %v586 = vtanh.pop %v566
    %v588 = vrot.slane %v530, 6
    %v590 = vmul.f32 %v585, %v588
    %592 = vrot.lane.b32.xlu0 %v586, 64
    %v593 = vpop.permute.xlu0 %592
    %v595 = vmul.f32 %v585, %v593
    %597 = vrot.lane.b32.xlu0 %v595, 32
    %v598 = vpop.permute.xlu0 %597
    %v600 = vadd.f32 %v590, %v598
    %v601 = vtanh.pop %v600
    %603 = vrot.lane.b32.xlu0 %v601, 64
    %v604 = vpop.permute.xlu0 %603
    %v606 = vmul.f32 %v585, %v604
    %v608 = vrot.slane %v606, 4
    %609 = vrot.lane.b32.xlu0 %v608, 32
    %v610 = vpop.permute.xlu0 %609
    %v611 = vsel %vm130, %v610, 0
    %613 = vmatpush.msra.mxu0 0.0
    %614 = vmatpush.msra.mxu0 0.0
    %615 = vmatpush.msra.mxu0 0.0
    %616 = vmatpush.msra.mxu0 0.0
    %617 = vmatpush.msra.mxu0 0.0
    %618 = vmatpush.msra.mxu0 0.0
    %619 = vmatpush.msra.mxu0 0.0
    %620 = vmatpush.msra.mxu0 0.0
    %621 = vmatpush.msra.mxu0 0.0
    %622 = vmatpush.msra.mxu0 0.0
    %623 = vmatpush.msra.mxu0 0.0
    %624 = vmatpush.msra.mxu0 0.0
    %625 = vmatpush.msra.mxu0 %v129
    %626 = vmatpush.msra.mxu0 %v128
    %627 = vmatpush.msra.mxu0 %v127
    %628 = vmatpush.msra.mxu0 %v126
    %629 = vmatmul.f32.gmra.mxu0 %v611
    %v630 = vpop.f32.mrf.mxu0
    %v631 = vadd.f32 0.0, %v630
    %632 = vdwg.mxu0
    %v634 = vrot.slane %v631, 2
    %v636 = vadd.f32 %v125, %v634
    %v637 = vxor.u32 %v636, 2147483648
    %v638 = vmul.f32 %v637, 1.442695
    %v639 = vpow.pop %v638
    %v640 = vadd.f32 %v639, 1.0
    %v641 = vrcp.pop %v640
    %v642 = vmul.f32 %v640, %v641
    %v643 = vsub.f32 1.0, %v642
    %v644 = vmul.f32 %v641, %v643
    %v645 = vadd.f32 %v641, %v644
    %vm646 = vweird.f32 %v640
    %vm647 = vweird.f32 %v641
    %vm648 = vmor %vm646, %vm647
    %v649 = vsel %vm648, %v641, %v645
    %v650 = vand.u32 2147483647, %v640
    %vm651 = vcmp.eq.f32.partialorder %v650, 8.507059e+37
    %v652 = vand.u32 %v640, 2147483648
    %v653 = vor.u32 1.1754944e-38, %v652
    %v654 = vsel %vm651, %v653, %v649
    %v655 = vmul.f32 1.0, %v654
    %v656 = vtanh.pop %v636
    %v658 = vrot.slane %v600, 6
    %v660 = vmul.f32 %v655, %v658
    %662 = vrot.lane.b32.xlu0 %v656, 64
    %v663 = vpop.permute.xlu0 %662
    %v665 = vmul.f32 %v655, %v663
    %667 = vrot.lane.b32.xlu0 %v665, 32
    %v668 = vpop.permute.xlu0 %667
    %v670 = vadd.f32 %v660, %v668
    %v671 = vtanh.pop %v670
    %673 = vrot.lane.b32.xlu0 %v671, 64
    %v674 = vpop.permute.xlu0 %673
    %v676 = vmul.f32 %v655, %v674
    %v677 = vsel %vm62, %v191, %v260
    %vm678 = vcmask 1043456
    %v679 = vsel %vm678, %v677, %v330
    %vm680 = vcmask 1045504
    %v681 = vsel %vm680, %v679, %v400
    %v682 = vsel %vm62, %v467, %v536
    %v683 = vsel %vm678, %v682, %v606
    %v684 = vsel %vm680, %v683, %v676
    %v686 = vrot.slane %v676, 6
    %v688 = vrot.slane %v606, 2
    %v690 = vrot.slane %v536, 6
    %v692 = vrot.slane %v467, 2
    %v695 = vrot.slane %v330, 2
    %v697 = vrot.slane %v260, 6
    %v699 = vrot.slane %v191, 2
    %v701 = vsel %vm62, %v686, %v688
    %v702 = vsel %vm678, %v701, %v690
    %v703 = vsel %vm680, %v702, %v692
    %v704 = vsel %vm62, %v402, %v695
    %v705 = vsel %vm678, %v704, %v697
    %v706 = vsel %vm680, %v705, %v699
    %709 = vrot.lane.b32.xlu0 %v681, 32
    %v710 = vpop.permute.xlu0 %709
    %711 = vrot.lane.b32.xlu0 %v684, 32
    %v712 = vpop.permute.xlu0 %711
    %717 = vrot.lane.b32.xlu0 %v703, 32
    %v718 = vpop.permute.xlu0 %717
    %719 = vrot.lane.b32.xlu0 %v706, 32
    %v720 = vpop.permute.xlu0 %719
    %v723 = vsel %vm91, %v710, %v718
    %v724 = vsel %vm91, %v712, %v720
    %v725 = vld [vmem:[#allocation2 + $0x78] sm:$0xff]
    %v726 = vld [vmem:[#allocation2 + $0x80] sm:$0xff]
    %v727 = vld [vmem:[#allocation2 + $0x88] sm:$0xff]
    %v728 = vld [vmem:[#allocation2 + $0x90] sm:$0xff]
    %v729 = vld [vmem:[#allocation2 + $0xb8] sm:$0x1]
    %v730 = vperm.slane %v729, 0
    %v732 = vsel %vm130, %v723, 0
    %v735 = vsel %vm130, %v724, 0
    %737 = vmatpush.msra.mxu0 0.0
    %738 = vmatpush.msra.mxu0 0.0
    %739 = vmatpush.msra.mxu0 0.0
    %740 = vmatpush.msra.mxu0 0.0
    %741 = vmatpush.msra.mxu0 0.0
    %742 = vmatpush.msra.mxu0 0.0
    %743 = vmatpush.msra.mxu0 0.0
    %744 = vmatpush.msra.mxu0 0.0
    %745 = vmatpush.msra.mxu0 0.0
    %746 = vmatpush.msra.mxu0 0.0
    %747 = vmatpush.msra.mxu0 0.0
    %748 = vmatpush.msra.mxu0 0.0
    %749 = vmatpush.msra.mxu0 %v728
    %750 = vmatpush.msra.mxu0 %v727
    %751 = vmatpush.msra.mxu0 %v726
    %752 = vmatpush.msra.mxu0 %v725
    %753 = vmatmul.f32.gmra.mxu0 %v732
    %v754 = vpop.f32.mrf.mxu0
    %v755 = vadd.f32 %v730, %v754
    %756 = vmatmul.f32.gmra.mxu0 %v735
    %v757 = vpop.f32.mrf.mxu0
    %v758 = vadd.f32 %v730, %v757
    %759 = vdwg.mxu0
    %v760 = vld [vmem:[#allocation2 + $0xc8] sm:$0x1]
    %vm761 = vcmp.gt.f32.partialorder %v760, 0.5
    %762 = vmatpush.msra.mxu0 0.0
    %763 = vmatpush.msra.mxu0 0.0
    %764 = vmatpush.msra.mxu0 0.0
    %765 = vmatpush.msra.mxu0 0.0
    %766 = vmatpush.msra.mxu0 0.0
    %767 = vmatpush.msra.mxu0 0.0
    %768 = vmatpush.msra.mxu0 0.0
    %769 = vmatpush.msra.mxu0 0.0
    %770 = vmatpush.msra.mxu0 0.0
    %771 = vmatpush.msra.mxu0 0.0
    %772 = vmatpush.msra.mxu0 0.0
    %773 = vmatpush.msra.mxu0 0.0
    %774 = vmatpush.msra.mxu0 0.0
    %775 = vmatpush.msra.mxu0 0.0
    %776 = vmatpush.msra.mxu0 %v758
    %777 = vmatpush.msra.mxu0 %v755
    %778 = vmatmul.f32.gmra.mxu0 %v93
    %v779 = vpop.f32.mrf.mxu0
    %v780 = vadd.f32 0.0, %v779
    %781 = vmatmul.f32.gmra.mxu0 %v96
    %v782 = vpop.f32.mrf.mxu0
    %v783 = vadd.f32 0.0, %v782
    %784 = vdwg.mxu0
    %v785 = vsel %vm761, 1, 0
    %v786 = vperm.slane %v785, 0
    %vm787 = vcmp.eq.s32.totalorder %v786, 1
    %v788 = vsel %vm787, %v755, %v780
    %v789 = vsel %vm787, %v758, %v783
    %v790 = vld [vmem:[#allocation2 + $0x98] sm:$0xff]
    %v791 = vld [vmem:[#allocation2 + $0xa0] sm:$0xff]
    %v792 = vld [vmem:[#allocation2 + $0xa8] sm:$0xff]
    %v793 = vld [vmem:[#allocation2 + $0xb0] sm:$0xff]
    %v794 = vld [vmem:[#allocation2 + $0xc0] sm:$0x1]
    %v795 = vperm.slane %v794, 0
    %796 = vmatpush.msra.mxu0 0.0
    %797 = vmatpush.msra.mxu0 0.0
    %798 = vmatpush.msra.mxu0 0.0
    %799 = vmatpush.msra.mxu0 0.0
    %800 = vmatpush.msra.mxu0 0.0
    %801 = vmatpush.msra.mxu0 0.0
    %802 = vmatpush.msra.mxu0 0.0
    %803 = vmatpush.msra.mxu0 0.0
    %804 = vmatpush.msra.mxu0 0.0
    %805 = vmatpush.msra.mxu0 0.0
    %806 = vmatpush.msra.mxu0 0.0
    %807 = vmatpush.msra.mxu0 0.0
    %808 = vmatpush.msra.mxu0 %v793
    %809 = vmatpush.msra.mxu0 %v792
    %810 = vmatpush.msra.mxu0 %v791
    %811 = vmatpush.msra.mxu0 %v790
    %812 = vmatmul.f32.gmra.mxu0 %v132
    %v813 = vpop.f32.mrf.mxu0
    %v814 = vadd.f32 %v795, %v813
    %815 = vdwg.mxu0
    %v816 = vadd.f32 %v788, %v814
    %v817 = vxor.u32 %v816, 2147483648
    %v818 = vmul.f32 %v817, 1.442695
    %v819 = vpow.pop %v818
    %v820 = vadd.f32 %v819, 1.0
    %v821 = vrcp.pop %v820
    %v822 = vmul.f32 %v820, %v821
    %v823 = vsub.f32 1.0, %v822
    %v824 = vmul.f32 %v821, %v823
    %v825 = vadd.f32 %v821, %v824
    %vm826 = vweird.f32 %v820
    %vm827 = vweird.f32 %v821
    %vm828 = vmor %vm826, %vm827
    %v829 = vsel %vm828, %v821, %v825
    %v830 = vand.u32 2147483647, %v820
    %vm831 = vcmp.eq.f32.partialorder %v830, 8.507059e+37
    %v832 = vand.u32 %v820, 2147483648
    %v833 = vor.u32 1.1754944e-38, %v832
    %v834 = vsel %vm831, %v833, %v829
    %v835 = vmul.f32 1.0, %v834
    %837 = vrot.lane.b32.xlu0 %v814, 64
    %v838 = vpop.permute.xlu0 %837
    %v840 = vmul.f32 %v835, %v838
    %842 = vrot.lane.b32.xlu0 %v840, 64
    %v843 = vpop.permute.xlu0 %842
    %v845 = vadd.f32 %v788, %v843
    %v846 = vtanh.pop %v845
    %v847 = vsub.f32 1.0, %v835
    %849 = vrot.lane.b32.xlu0 %v846, 96
    %v850 = vpop.permute.xlu0 %849
    %v852 = vmul.f32 %v847, %v850
    %v853 = vmul.f32 %v835, 0.0
    %v854 = vadd.f32 %v852, %v853
    %856 = vrot.lane.b32.xlu0 %v854, 96
    %v857 = vpop.permute.xlu0 %856
    %v858 = vsel %vm130, %v857, 0
    %860 = vmatpush.msra.mxu0 0.0
    %861 = vmatpush.msra.mxu0 0.0
    %862 = vmatpush.msra.mxu0 0.0
    %863 = vmatpush.msra.mxu0 0.0
    %864 = vmatpush.msra.mxu0 0.0
    %865 = vmatpush.msra.mxu0 0.0
    %866 = vmatpush.msra.mxu0 0.0
    %867 = vmatpush.msra.mxu0 0.0
    %868 = vmatpush.msra.mxu0 0.0
    %869 = vmatpush.msra.mxu0 0.0
    %870 = vmatpush.msra.mxu0 0.0
    %871 = vmatpush.msra.mxu0 0.0
    %872 = vmatpush.msra.mxu0 %v793
    %873 = vmatpush.msra.mxu0 %v792
    %874 = vmatpush.msra.mxu0 %v791
    %875 = vmatpush.msra.mxu0 %v790
    %876 = vmatmul.f32.gmra.mxu0 %v858
    %v877 = vpop.f32.mrf.mxu0
    %v878 = vadd.f32 %v795, %v877
    %879 = vdwg.mxu0
    %v881 = vrot.slane %v878, 6
    %v883 = vadd.f32 %v788, %v881
    %v884 = vxor.u32 %v883, 2147483648
    %v885 = vmul.f32 %v884, 1.442695
    %v886 = vpow.pop %v885
    %v887 = vadd.f32 %v886, 1.0
    %v888 = vrcp.pop %v887
    %v889 = vmul.f32 %v887, %v888
    %v890 = vsub.f32 1.0, %v889
    %v891 = vmul.f32 %v888, %v890
    %v892 = vadd.f32 %v888, %v891
    %vm893 = vweird.f32 %v887
    %vm894 = vweird.f32 %v888
    %vm895 = vmor %vm893, %vm894
    %v896 = vsel %vm895, %v888, %v892
    %v897 = vand.u32 2147483647, %v887
    %vm898 = vcmp.eq.f32.partialorder %v897, 8.507059e+37
    %v899 = vand.u32 %v887, 2147483648
    %v900 = vor.u32 1.1754944e-38, %v899
    %v901 = vsel %vm898, %v900, %v896
    %v902 = vmul.f32 1.0, %v901
    %903 = vrot.lane.b32.xlu0 %v881, 64
    %v904 = vpop.permute.xlu0 %903
    %v906 = vmul.f32 %v902, %v904
    %908 = vrot.lane.b32.xlu0 %v906, 64
    %v909 = vpop.permute.xlu0 %908
    %v911 = vadd.f32 %v788, %v909
    %v912 = vtanh.pop %v911
    %v913 = vsub.f32 1.0, %v902
    %915 = vrot.lane.b32.xlu0 %v912, 96
    %v916 = vpop.permute.xlu0 %915
    %v918 = vmul.f32 %v913, %v916
    %v919 = vrot.slane %v854, 6
    %v921 = vmul.f32 %v902, %v919
    %v922 = vadd.f32 %v918, %v921
    %v924 = vrot.slane %v922, 2
    %925 = vrot.lane.b32.xlu0 %v924, 96
    %v926 = vpop.permute.xlu0 %925
    %v927 = vsel %vm130, %v926, 0
    %929 = vmatpush.msra.mxu0 0.0
    %930 = vmatpush.msra.mxu0 0.0
    %931 = vmatpush.msra.mxu0 0.0
    %932 = vmatpush.msra.mxu0 0.0
    %933 = vmatpush.msra.mxu0 0.0
    %934 = vmatpush.msra.mxu0 0.0
    %935 = vmatpush.msra.mxu0 0.0
    %936 = vmatpush.msra.mxu0 0.0
    %937 = vmatpush.msra.mxu0 0.0
    %938 = vmatpush.msra.mxu0 0.0
    %939 = vmatpush.msra.mxu0 0.0
    %940 = vmatpush.msra.mxu0 0.0
    %941 = vmatpush.msra.mxu0 %v793
    %942 = vmatpush.msra.mxu0 %v792
    %943 = vmatpush.msra.mxu0 %v791
    %944 = vmatpush.msra.mxu0 %v790
    %945 = vmatmul.f32.gmra.mxu0 %v927
    %v946 = vpop.f32.mrf.mxu0
    %v947 = vadd.f32 %v795, %v946
    %948 = vdwg.mxu0
    %v950 = vrot.slane %v947, 4
    %v952 = vadd.f32 %v788, %v950
    %v953 = vxor.u32 %v952, 2147483648
    %v954 = vmul.f32 %v953, 1.442695
    %v955 = vpow.pop %v954
    %v956 = vadd.f32 %v955, 1.0
    %v957 = vrcp.pop %v956
    %v958 = vmul.f32 %v956, %v957
    %v959 = vsub.f32 1.0, %v958
    %v960 = vmul.f32 %v957, %v959
    %v961 = vadd.f32 %v957, %v960
    %vm962 = vweird.f32 %v956
    %vm963 = vweird.f32 %v957
    %vm964 = vmor %vm962, %vm963
    %v965 = vsel %vm964, %v957, %v961
    %v966 = vand.u32 2147483647, %v956
    %vm967 = vcmp.eq.f32.partialorder %v966, 8.507059e+37
    %v968 = vand.u32 %v956, 2147483648
    %v969 = vor.u32 1.1754944e-38, %v968
    %v970 = vsel %vm967, %v969, %v965
    %v971 = vmul.f32 1.0, %v970
    %972 = vrot.lane.b32.xlu0 %v950, 64
    %v973 = vpop.permute.xlu0 %972
    %v975 = vmul.f32 %v971, %v973
    %977 = vrot.lane.b32.xlu0 %v975, 64
    %v978 = vpop.permute.xlu0 %977
    %v980 = vadd.f32 %v788, %v978
    %v981 = vtanh.pop %v980
    %v982 = vsub.f32 1.0, %v971
    %984 = vrot.lane.b32.xlu0 %v981, 96
    %v985 = vpop.permute.xlu0 %984
    %v987 = vmul.f32 %v982, %v985
    %v988 = vrot.slane %v922, 6
    %v990 = vmul.f32 %v971, %v988
    %v991 = vadd.f32 %v987, %v990
    %v993 = vrot.slane %v991, 4
    %994 = vrot.lane.b32.xlu0 %v993, 96
    %v995 = vpop.permute.xlu0 %994
    %v996 = vsel %vm130, %v995, 0
    %998 = vmatpush.msra.mxu0 0.0
    %999 = vmatpush.msra.mxu0 0.0
    %1000 = vmatpush.msra.mxu0 0.0
    %1001 = vmatpush.msra.mxu0 0.0
    %1002 = vmatpush.msra.mxu0 0.0
    %1003 = vmatpush.msra.mxu0 0.0
    %1004 = vmatpush.msra.mxu0 0.0
    %1005 = vmatpush.msra.mxu0 0.0
    %1006 = vmatpush.msra.mxu0 0.0
    %1007 = vmatpush.msra.mxu0 0.0
    %1008 = vmatpush.msra.mxu0 0.0
    %1009 = vmatpush.msra.mxu0 0.0
    %1010 = vmatpush.msra.mxu0 %v793
    %1011 = vmatpush.msra.mxu0 %v792
    %1012 = vmatpush.msra.mxu0 %v791
    %1013 = vmatpush.msra.mxu0 %v790
    %1014 = vmatmul.f32.gmra.mxu0 %v996
    %v1015 = vpop.f32.mrf.mxu0
    %v1016 = vadd.f32 %v795, %v1015
    %1017 = vdwg.mxu0
    %v1019 = vrot.slane %v1016, 2
    %v1021 = vadd.f32 %v788, %v1019
    %v1022 = vxor.u32 %v1021, 2147483648
    %v1023 = vmul.f32 %v1022, 1.442695
    %v1024 = vpow.pop %v1023
    %v1025 = vadd.f32 %v1024, 1.0
    %v1026 = vrcp.pop %v1025
    %v1027 = vmul.f32 %v1025, %v1026
    %v1028 = vsub.f32 1.0, %v1027
    %v1029 = vmul.f32 %v1026, %v1028
    %v1030 = vadd.f32 %v1026, %v1029
    %vm1031 = vweird.f32 %v1025
    %vm1032 = vweird.f32 %v1026
    %vm1033 = vmor %vm1031, %vm1032
    %v1034 = vsel %vm1033, %v1026, %v1030
    %v1035 = vand.u32 2147483647, %v1025
    %vm1036 = vcmp.eq.f32.partialorder %v1035, 8.507059e+37
    %v1037 = vand.u32 %v1025, 2147483648
    %v1038 = vor.u32 1.1754944e-38, %v1037
    %v1039 = vsel %vm1036, %v1038, %v1034
    %v1040 = vmul.f32 1.0, %v1039
    %1041 = vrot.lane.b32.xlu0 %v1019, 64
    %v1042 = vpop.permute.xlu0 %1041
    %v1044 = vmul.f32 %v1040, %v1042
    %1046 = vrot.lane.b32.xlu0 %v1044, 64
    %v1047 = vpop.permute.xlu0 %1046
    %v1049 = vadd.f32 %v788, %v1047
    %v1050 = vtanh.pop %v1049
    %v1051 = vsub.f32 1.0, %v1040
    %1053 = vrot.lane.b32.xlu0 %v1050, 96
    %v1054 = vpop.permute.xlu0 %1053
    %v1056 = vmul.f32 %v1051, %v1054
    %v1057 = vrot.slane %v991, 6
    %v1059 = vmul.f32 %v1040, %v1057
    %v1060 = vadd.f32 %v1056, %v1059
    %v1062 = vrot.slane %v1060, 6
    %1063 = vrot.lane.b32.xlu0 %v1062, 96
    %v1064 = vpop.permute.xlu0 %1063
    %v1065 = vsel %vm130, %v1064, 0
    %1067 = vmatpush.msra.mxu0 0.0
    %1068 = vmatpush.msra.mxu0 0.0
    %1069 = vmatpush.msra.mxu0 0.0
    %1070 = vmatpush.msra.mxu0 0.0
    %1071 = vmatpush.msra.mxu0 0.0
    %1072 = vmatpush.msra.mxu0 0.0
    %1073 = vmatpush.msra.mxu0 0.0
    %1074 = vmatpush.msra.mxu0 0.0
    %1075 = vmatpush.msra.mxu0 0.0
    %1076 = vmatpush.msra.mxu0 0.0
    %1077 = vmatpush.msra.mxu0 0.0
    %1078 = vmatpush.msra.mxu0 0.0
    %1079 = vmatpush.msra.mxu0 %v793
    %1080 = vmatpush.msra.mxu0 %v792
    %1081 = vmatpush.msra.mxu0 %v791
    %1082 = vmatpush.msra.mxu0 %v790
    %1083 = vmatmul.f32.gmra.mxu0 %v1065
    %v1084 = vpop.f32.mrf.mxu0
    %v1085 = vadd.f32 %v795, %v1084
    %1086 = vdwg.mxu0
    %v1087 = vadd.f32 %v789, %v1085
    %v1088 = vxor.u32 %v1087, 2147483648
    %v1089 = vmul.f32 %v1088, 1.442695
    %v1090 = vpow.pop %v1089
    %v1091 = vadd.f32 %v1090, 1.0
    %v1092 = vrcp.pop %v1091
    %v1093 = vmul.f32 %v1091, %v1092
    %v1094 = vsub.f32 1.0, %v1093
    %v1095 = vmul.f32 %v1092, %v1094
    %v1096 = vadd.f32 %v1092, %v1095
    %vm1097 = vweird.f32 %v1091
    %vm1098 = vweird.f32 %v1092
    %vm1099 = vmor %vm1097, %vm1098
    %v1100 = vsel %vm1099, %v1092, %v1096
    %v1101 = vand.u32 2147483647, %v1091
    %vm1102 = vcmp.eq.f32.partialorder %v1101, 8.507059e+37
    %v1103 = vand.u32 %v1091, 2147483648
    %v1104 = vor.u32 1.1754944e-38, %v1103
    %v1105 = vsel %vm1102, %v1104, %v1100
    %v1106 = vmul.f32 1.0, %v1105
    %1108 = vrot.lane.b32.xlu0 %v1085, 64
    %v1109 = vpop.permute.xlu0 %1108
    %v1111 = vmul.f32 %v1106, %v1109
    %1113 = vrot.lane.b32.xlu0 %v1111, 64
    %v1114 = vpop.permute.xlu0 %1113
    %v1116 = vadd.f32 %v789, %v1114
    %v1117 = vtanh.pop %v1116
    %v1118 = vsub.f32 1.0, %v1106
    %1120 = vrot.lane.b32.xlu0 %v1117, 96
    %v1121 = vpop.permute.xlu0 %1120
    %v1123 = vmul.f32 %v1118, %v1121
    %v1125 = vmul.f32 %v1106, %v1062
    %v1126 = vadd.f32 %v1123, %v1125
    %1128 = vrot.lane.b32.xlu0 %v1126, 96
    %v1129 = vpop.permute.xlu0 %1128
    %v1130 = vsel %vm130, %v1129, 0
    %1132 = vmatpush.msra.mxu0 0.0
    %1133 = vmatpush.msra.mxu0 0.0
    %1134 = vmatpush.msra.mxu0 0.0
    %1135 = vmatpush.msra.mxu0 0.0
    %1136 = vmatpush.msra.mxu0 0.0
    %1137 = vmatpush.msra.mxu0 0.0
    %1138 = vmatpush.msra.mxu0 0.0
    %1139 = vmatpush.msra.mxu0 0.0
    %1140 = vmatpush.msra.mxu0 0.0
    %1141 = vmatpush.msra.mxu0 0.0
    %1142 = vmatpush.msra.mxu0 0.0
    %1143 = vmatpush.msra.mxu0 0.0
    %1144 = vmatpush.msra.mxu0 %v793
    %1145 = vmatpush.msra.mxu0 %v792
    %1146 = vmatpush.msra.mxu0 %v791
    %1147 = vmatpush.msra.mxu0 %v790
    %1148 = vmatmul.f32.gmra.mxu0 %v1130
    %v1149 = vpop.f32.mrf.mxu0
    %v1150 = vadd.f32 %v795, %v1149
    %1151 = vdwg.mxu0
    %v1153 = vrot.slane %v1150, 6
    %v1155 = vadd.f32 %v789, %v1153
    %v1156 = vxor.u32 %v1155, 2147483648
    %v1157 = vmul.f32 %v1156, 1.442695
    %v1158 = vpow.pop %v1157
    %v1159 = vadd.f32 %v1158, 1.0
    %v1160 = vrcp.pop %v1159
    %v1161 = vmul.f32 %v1159, %v1160
    %v1162 = vsub.f32 1.0, %v1161
    %v1163 = vmul.f32 %v1160, %v1162
    %v1164 = vadd.f32 %v1160, %v1163
    %vm1165 = vweird.f32 %v1159
    %vm1166 = vweird.f32 %v1160
    %vm1167 = vmor %vm1165, %vm1166
    %v1168 = vsel %vm1167, %v1160, %v1164
    %v1169 = vand.u32 2147483647, %v1159
    %vm1170 = vcmp.eq.f32.partialorder %v1169, 8.507059e+37
    %v1171 = vand.u32 %v1159, 2147483648
    %v1172 = vor.u32 1.1754944e-38, %v1171
    %v1173 = vsel %vm1170, %v1172, %v1168
    %v1174 = vmul.f32 1.0, %v1173
    %1175 = vrot.lane.b32.xlu0 %v1153, 64
    %v1176 = vpop.permute.xlu0 %1175
    %v1178 = vmul.f32 %v1174, %v1176
    %1180 = vrot.lane.b32.xlu0 %v1178, 64
    %v1181 = vpop.permute.xlu0 %1180
    %v1183 = vadd.f32 %v789, %v1181
    %v1184 = vtanh.pop %v1183
    %v1185 = vsub.f32 1.0, %v1174
    %1187 = vrot.lane.b32.xlu0 %v1184, 96
    %v1188 = vpop.permute.xlu0 %1187
    %v1190 = vmul.f32 %v1185, %v1188
    %v1191 = vrot.slane %v1126, 6
    %v1193 = vmul.f32 %v1174, %v1191
    %v1194 = vadd.f32 %v1190, %v1193
    %v1196 = vrot.slane %v1194, 2
    %1197 = vrot.lane.b32.xlu0 %v1196, 96
    %v1198 = vpop.permute.xlu0 %1197
    %v1199 = vsel %vm130, %v1198, 0
    %1201 = vmatpush.msra.mxu0 0.0
    %1202 = vmatpush.msra.mxu0 0.0
    %1203 = vmatpush.msra.mxu0 0.0
    %1204 = vmatpush.msra.mxu0 0.0
    %1205 = vmatpush.msra.mxu0 0.0
    %1206 = vmatpush.msra.mxu0 0.0
    %1207 = vmatpush.msra.mxu0 0.0
    %1208 = vmatpush.msra.mxu0 0.0
    %1209 = vmatpush.msra.mxu0 0.0
    %1210 = vmatpush.msra.mxu0 0.0
    %1211 = vmatpush.msra.mxu0 0.0
    %1212 = vmatpush.msra.mxu0 0.0
    %1213 = vmatpush.msra.mxu0 %v793
    %1214 = vmatpush.msra.mxu0 %v792
    %1215 = vmatpush.msra.mxu0 %v791
    %1216 = vmatpush.msra.mxu0 %v790
    %1217 = vmatmul.f32.gmra.mxu0 %v1199
    %v1218 = vpop.f32.mrf.mxu0
    %v1219 = vadd.f32 %v795, %v1218
    %1220 = vdwg.mxu0
    %v1222 = vrot.slane %v1219, 4
    %v1224 = vadd.f32 %v789, %v1222
    %v1225 = vxor.u32 %v1224, 2147483648
    %v1226 = vmul.f32 %v1225, 1.442695
    %v1227 = vpow.pop %v1226
    %v1228 = vadd.f32 %v1227, 1.0
    %v1229 = vrcp.pop %v1228
    %v1230 = vmul.f32 %v1228, %v1229
    %v1231 = vsub.f32 1.0, %v1230
    %v1232 = vmul.f32 %v1229, %v1231
    %v1233 = vadd.f32 %v1229, %v1232
    %vm1234 = vweird.f32 %v1228
    %vm1235 = vweird.f32 %v1229
    %vm1236 = vmor %vm1234, %vm1235
    %v1237 = vsel %vm1236, %v1229, %v1233
    %v1238 = vand.u32 2147483647, %v1228
    %vm1239 = vcmp.eq.f32.partialorder %v1238, 8.507059e+37
    %v1240 = vand.u32 %v1228, 2147483648
    %v1241 = vor.u32 1.1754944e-38, %v1240
    %v1242 = vsel %vm1239, %v1241, %v1237
    %v1243 = vmul.f32 1.0, %v1242
    %1244 = vrot.lane.b32.xlu0 %v1222, 64
    %v1245 = vpop.permute.xlu0 %1244
    %v1247 = vmul.f32 %v1243, %v1245
    %1249 = vrot.lane.b32.xlu0 %v1247, 64
    %v1250 = vpop.permute.xlu0 %1249
    %v1252 = vadd.f32 %v789, %v1250
    %v1253 = vtanh.pop %v1252
    %v1254 = vsub.f32 1.0, %v1243
    %1256 = vrot.lane.b32.xlu0 %v1253, 96
    %v1257 = vpop.permute.xlu0 %1256
    %v1259 = vmul.f32 %v1254, %v1257
    %v1260 = vrot.slane %v1194, 6
    %v1262 = vmul.f32 %v1243, %v1260
    %v1263 = vadd.f32 %v1259, %v1262
    %v1265 = vrot.slane %v1263, 4
    %1266 = vrot.lane.b32.xlu0 %v1265, 96
    %v1267 = vpop.permute.xlu0 %1266
    %v1268 = vsel %vm130, %v1267, 0
    %1270 = vmatpush.msra.mxu0 0.0
    %1271 = vmatpush.msra.mxu0 0.0
    %1272 = vmatpush.msra.mxu0 0.0
    %1273 = vmatpush.msra.mxu0 0.0
    %1274 = vmatpush.msra.mxu0 0.0
    %1275 = vmatpush.msra.mxu0 0.0
    %1276 = vmatpush.msra.mxu0 0.0
    %1277 = vmatpush.msra.mxu0 0.0
    %1278 = vmatpush.msra.mxu0 0.0
    %1279 = vmatpush.msra.mxu0 0.0
    %1280 = vmatpush.msra.mxu0 0.0
    %1281 = vmatpush.msra.mxu0 0.0
    %1282 = vmatpush.msra.mxu0 %v793
    %1283 = vmatpush.msra.mxu0 %v792
    %1284 = vmatpush.msra.mxu0 %v791
    %1285 = vmatpush.msra.mxu0 %v790
    %1286 = vmatmul.f32.gmra.mxu0 %v1268
    %v1287 = vpop.f32.mrf.mxu0
    %v1288 = vadd.f32 %v795, %v1287
    %1289 = vdwg.mxu0
    %v1291 = vrot.slane %v1288, 2
    %v1293 = vadd.f32 %v789, %v1291
    %v1294 = vxor.u32 %v1293, 2147483648
    %v1295 = vmul.f32 %v1294, 1.442695
    %v1296 = vpow.pop %v1295
    %v1297 = vadd.f32 %v1296, 1.0
    %v1298 = vrcp.pop %v1297
    %v1299 = vmul.f32 %v1297, %v1298
    %v1300 = vsub.f32 1.0, %v1299
    %v1301 = vmul.f32 %v1298, %v1300
    %v1302 = vadd.f32 %v1298, %v1301
    %vm1303 = vweird.f32 %v1297
    %vm1304 = vweird.f32 %v1298
    %vm1305 = vmor %vm1303, %vm1304
    %v1306 = vsel %vm1305, %v1298, %v1302
    %v1307 = vand.u32 2147483647, %v1297
    %vm1308 = vcmp.eq.f32.partialorder %v1307, 8.507059e+37
    %v1309 = vand.u32 %v1297, 2147483648
    %v1310 = vor.u32 1.1754944e-38, %v1309
    %v1311 = vsel %vm1308, %v1310, %v1306
    %v1312 = vmul.f32 1.0, %v1311
    %1313 = vrot.lane.b32.xlu0 %v1291, 64
    %v1314 = vpop.permute.xlu0 %1313
    %v1316 = vmul.f32 %v1312, %v1314
    %1318 = vrot.lane.b32.xlu0 %v1316, 64
    %v1319 = vpop.permute.xlu0 %1318
    %v1321 = vadd.f32 %v789, %v1319
    %v1322 = vtanh.pop %v1321
    %v1323 = vsub.f32 1.0, %v1312
    %1325 = vrot.lane.b32.xlu0 %v1322, 96
    %v1326 = vpop.permute.xlu0 %1325
    %v1328 = vmul.f32 %v1323, %v1326
    %v1329 = vrot.slane %v1263, 6
    %v1331 = vmul.f32 %v1312, %v1329
    %v1332 = vadd.f32 %v1328, %v1331
    %v1333 = vsel %vm62, %v854, %v922
    %v1334 = vsel %vm678, %v1333, %v991
    %v1335 = vsel %vm680, %v1334, %v1060
    %v1336 = vsel %vm62, %v1126, %v1194
    %v1337 = vsel %vm678, %v1336, %v1263
    %v1338 = vsel %vm680, %v1337, %v1332
    %v1340 = vrot.slane %v1332, 6
    %v1342 = vrot.slane %v1263, 2
    %v1344 = vrot.slane %v1126, 2
    %v1346 = vrot.slane %v991, 2
    %v1348 = vrot.slane %v854, 2
    %v1350 = vsel %vm62, %v1340, %v1342
    %v1351 = vsel %vm678, %v1350, %v1260
    %v1352 = vsel %vm680, %v1351, %v1344
    %v1353 = vsel %vm62, %v1062, %v1346
    %v1354 = vsel %vm678, %v1353, %v988
    %v1355 = vsel %vm680, %v1354, %v1348
    %1358 = vrot.lane.b32.xlu0 %v1335, 96
    %v1359 = vpop.permute.xlu0 %1358
    %1360 = vrot.lane.b32.xlu0 %v1338, 96
    %v1361 = vpop.permute.xlu0 %1360
    %1366 = vrot.lane.b32.xlu0 %v1352, 96
    %v1367 = vpop.permute.xlu0 %1366
    %1368 = vrot.lane.b32.xlu0 %v1355, 96
    %v1369 = vpop.permute.xlu0 %1368
    %v1372 = vsel %vm91, %v1359, %v1367
    %v1373 = vsel %vm91, %v1361, %v1369
    %v1374 = vld [vmem:[#allocation2 + $0xf0] sm:$0xff]
    %v1375 = vld [vmem:[#allocation2 + $0xf8] sm:$0xff]
    %v1376 = vld [vmem:[#allocation2 + $0x100] sm:$0xff]
    %v1377 = vld [vmem:[#allocation2 + $0x108] sm:$0x1]
    %v1378 = vld [vmem:[#allocation2 + $0xd0] sm:$0xff]
    %v1379 = vld [vmem:[#allocation2 + $0xd8] sm:$0xff]
    %v1380 = vld [vmem:[#allocation2 + $0xe0] sm:$0xff]
    %v1381 = vld [vmem:[#allocation2 + $0xe8] sm:$0xff]
    %v1383 = vsel %vm130, %v1372, 0
    %v1386 = vsel %vm130, %v1373, 0
    %1388 = vmatpush.msra.mxu0 0.0
    %1389 = vmatpush.msra.mxu0 0.0
    %1390 = vmatpush.msra.mxu0 0.0
    %1391 = vmatpush.msra.mxu0 0.0
    %1392 = vmatpush.msra.mxu0 0.0
    %1393 = vmatpush.msra.mxu0 0.0
    %1394 = vmatpush.msra.mxu0 0.0
    %1395 = vmatpush.msra.mxu0 0.0
    %1396 = vmatpush.msra.mxu0 0.0
    %1397 = vmatpush.msra.mxu0 0.0
    %1398 = vmatpush.msra.mxu0 0.0
    %1399 = vmatpush.msra.mxu0 0.0
    %1400 = vmatpush.msra.mxu0 %v1381
    %1401 = vmatpush.msra.mxu0 %v1380
    %1402 = vmatpush.msra.mxu0 %v1379
    %1403 = vmatpush.msra.mxu0 %v1378
    %1404 = vmatmul.f32.gmra.mxu0 %v1383
    %v1405 = vpop.f32.mrf.mxu0
    %v1406 = vadd.f32 0.0, %v1405
    %1407 = vmatmul.f32.gmra.mxu0 %v1386
    %v1408 = vpop.f32.mrf.mxu0
    %v1409 = vadd.f32 0.0, %v1408
    %1410 = vdwg.mxu0
    %v1412 = vsel %vm91, %v27, 0
    %1414 = vmatpush.msra.mxu0 0.0
    %1415 = vmatpush.msra.mxu0 0.0
    %1416 = vmatpush.msra.mxu0 0.0
    %1417 = vmatpush.msra.mxu0 0.0
    %1418 = vmatpush.msra.mxu0 0.0
    %1419 = vmatpush.msra.mxu0 0.0
    %1420 = vmatpush.msra.mxu0 0.0
    %1421 = vmatpush.msra.mxu0 0.0
    %1422 = vmatpush.msra.mxu0 0.0
    %1423 = vmatpush.msra.mxu0 0.0
    %1424 = vmatpush.msra.mxu0 0.0
    %1425 = vmatpush.msra.mxu0 0.0
    %1426 = vmatpush.msra.mxu0 0.0
    %1427 = vmatpush.msra.mxu0 0.0
    %1428 = vmatpush.msra.mxu0 %v1409
    %1429 = vmatpush.msra.mxu0 %v1406
    %1430 = vmatmul.f32.gmra.mxu0 %v1412
    %v1431 = vpop.f32.mrf.mxu0
    %v1432 = vadd.f32 0.0, %v1431
    %1433 = vdwg.mxu0
    %v1434 = vmul.f32 %v1432, 0.2
    %v1435 = vmul.f32 %v1434, %v1434
    %vm1436 = vcmask 203776
    %v1438 = vsel %vm1436, %v1435, 0
    %vm1440 = vcmask 1040384
    %v1442 = vsel %vm1440, %v1377, 0
    %1444 = vmatpush.msra.mxu0 0.0
    %1445 = vmatpush.msra.mxu0 0.0
    %1446 = vmatpush.msra.mxu0 0.0
    %1447 = vmatpush.msra.mxu0 0.0
    %1448 = vmatpush.msra.mxu0 0.0
    %1449 = vmatpush.msra.mxu0 0.0
    %1450 = vmatpush.msra.mxu0 0.0
    %1451 = vmatpush.msra.mxu0 0.0
    %1452 = vmatpush.msra.mxu0 0.0
    %1453 = vmatpush.msra.mxu0 0.0
    %1454 = vmatpush.msra.mxu0 0.0
    %1455 = vmatpush.msra.mxu0 0.0
    %1456 = vmatpush.msra.mxu0 %v1442
    %1457 = vmatpush.msra.mxu0 %v1376
    %1458 = vmatpush.msra.mxu0 %v1375
    %1459 = vmatpush.msra.mxu0 %v1374
    %1460 = vmatmul.f32.gmra.mxu0 %v1438
    %v1461 = vpop.f32.mrf.mxu0
    %v1462 = vadd.f32 1e-07, %v1461
    %1463 = vdwg.mxu0
    %v1464 = vrsqrt.pop %v1462
    %v1465 = vmul.f32 %v1464, %v1462
    %v1466 = vmul.f32 %v1465, %v1464
    %v1467 = vmul.f32 0.5, %v1466
    %v1468 = vsub.f32 1.5, %v1467
    %v1469 = vmul.f32 %v1464, %v1468
    %vm1470 = vweird.f32 %v1462
    %vm1471 = vweird.f32 %v1464
    %vm1472 = vmor %vm1470, %vm1471
    %v1473 = vsel %vm1472, %v1464, %v1469
    %v1474 = vmul.f32 %v1434, %v1473
    %v1476 = vrot.slane %v1474, 6
    %v1478 = vrot.slane %v1474, 4
    %v1480 = vrot.slane %v1474, 2
    %v1482 = vsel %vm62, %v1474, %v1476
    %v1483 = vsel %vm678, %v1482, %v1478
    %v1484 = vsel %vm680, %v1483, %v1480
    %v1485 = vmul.f32 %v1484, %v1406
    %v1486 = vmul.f32 %v1484, %v1409
    %v1488 = vsel %vm1436, %v1485, 0
    %v1491 = vsel %vm1436, %v1486, 0
    %1493 = vmatpush.msra.mxu0 0.0
    %1494 = vmatpush.msra.mxu0 0.0
    %1495 = vmatpush.msra.mxu0 0.0
    %1496 = vmatpush.msra.mxu0 0.0
    %1497 = vmatpush.msra.mxu0 0.0
    %1498 = vmatpush.msra.mxu0 0.0
    %1499 = vmatpush.msra.mxu0 0.0
    %1500 = vmatpush.msra.mxu0 0.0
    %1501 = vmatpush.msra.mxu0 0.0
    %1502 = vmatpush.msra.mxu0 0.0
    %1503 = vmatpush.msra.mxu0 0.0
    %1504 = vmatpush.msra.mxu0 0.0
    %1505 = vmatpush.msra.mxu0 %v1442
    %1506 = vmatpush.msra.mxu0 %v1376
    %1507 = vmatpush.msra.mxu0 %v1375
    %1508 = vmatpush.msra.mxu0 %v1374
    %1509 = vmatmul.f32.gmra.mxu0 %v1488
    %v1510 = vpop.f32.mrf.mxu0
    %v1511 = vadd.f32 0.0, %v1510
    %1512 = vmatmul.f32.gmra.mxu0 %v1491
    %v1513 = vpop.f32.mrf.mxu0
    %v1514 = vadd.f32 0.0, %v1513
    %1515 = vdwg.mxu0
    %v1516 = vsel %vm1436, %v1511, -inf
    %1517 = vmax.xlane.f32.xlu0 %v1516
    %v1518 = vpop.xlane.xlu0 %1517
    %v1519 = vsel %vm1436, %v1514, -inf
    %1520 = vmax.xlane.f32.xlu0 %v1519
    %v1521 = vpop.xlane.xlu0 %1520
    %v1522 = vsub.f32 %v1511, %v1518
    %v1523 = vsub.f32 %v1514, %v1521
    %v1524 = vmul.f32 %v1522, 1.442695
    %v1525 = vpow.pop %v1524
    %v1526 = vmul.f32 %v1523, 1.442695
    %v1527 = vpow.pop %v1526
    %v1528 = vsel %vm1436, %v1525, 0.0
    %1529 = vadd.xlane.f32.xlu0 %v1528
    %v1530 = vpop.xlane.xlu0 %1529
    %v1531 = vsel %vm1436, %v1527, 0.0
    %1532 = vadd.xlane.f32.xlu0 %v1531
    %v1533 = vpop.xlane.xlu0 %1532
    %v1534 = vrcp.pop %v1530
    %v1535 = vrcp.pop %v1533
    %v1536 = vmul.f32 %v1534, 5.0
    %v1537 = vmul.f32 %v1535, 5.0
    %v1538 = vmul.f32 %v1525, %v1536
    %v1539 = vmul.f32 %v1527, %v1537
    %v1540 = vmul.f32 %v1538, %v1406
    %v1541 = vmul.f32 %v1539, %v1409
    %1542 = vmatpush.msra.mxu0 0.0
    %1543 = vmatpush.msra.mxu0 0.0
    %1544 = vmatpush.msra.mxu0 0.0
    %1545 = vmatpush.msra.mxu0 0.0
    %1546 = vmatpush.msra.mxu0 0.0
    %1547 = vmatpush.msra.mxu0 0.0
    %1548 = vmatpush.msra.mxu0 0.0
    %1549 = vmatpush.msra.mxu0 0.0
    %1550 = vmatpush.msra.mxu0 0.0
    %1551 = vmatpush.msra.mxu0 0.0
    %1552 = vmatpush.msra.mxu0 0.0
    %1553 = vmatpush.msra.mxu0 0.0
    %1554 = vmatpush.msra.mxu0 0.0
    %1555 = vmatpush.msra.mxu0 0.0
    %1556 = vmatpush.msra.mxu0 %v1541
    %1557 = vmatpush.msra.mxu0 %v1540
    %1558 = vmatmul.f32.gmra.mxu0 %v1412
    %v1559 = vpop.f32.mrf.mxu0
    %v1560 = vadd.f32 0.0, %v1559
    %1561 = vdwg.mxu0
    %v1562 = vmul.f32 %v1560, %v1560
    %v1564 = vsel %vm1436, %v1562, 0
    %1566 = vmatpush.msra.mxu0 0.0
    %1567 = vmatpush.msra.mxu0 0.0
    %1568 = vmatpush.msra.mxu0 0.0
    %1569 = vmatpush.msra.mxu0 0.0
    %1570 = vmatpush.msra.mxu0 0.0
    %1571 = vmatpush.msra.mxu0 0.0
    %1572 = vmatpush.msra.mxu0 0.0
    %1573 = vmatpush.msra.mxu0 0.0
    %1574 = vmatpush.msra.mxu0 0.0
    %1575 = vmatpush.msra.mxu0 0.0
    %1576 = vmatpush.msra.mxu0 0.0
    %1577 = vmatpush.msra.mxu0 0.0
    %1578 = vmatpush.msra.mxu0 %v1442
    %1579 = vmatpush.msra.mxu0 %v1376
    %1580 = vmatpush.msra.mxu0 %v1375
    %1581 = vmatpush.msra.mxu0 %v1374
    %1582 = vmatmul.f32.gmra.mxu0 %v1564
    %v1583 = vpop.f32.mrf.mxu0
    %v1584 = vadd.f32 1e-07, %v1583
    %1585 = vdwg.mxu0
    %v1586 = vrsqrt.pop %v1584
    %v1587 = vmul.f32 %v1586, %v1584
    %v1588 = vmul.f32 %v1587, %v1586
    %v1589 = vmul.f32 0.5, %v1588
    %v1590 = vsub.f32 1.5, %v1589
    %v1591 = vmul.f32 %v1586, %v1590
    %vm1592 = vweird.f32 %v1584
    %vm1593 = vweird.f32 %v1586
    %vm1594 = vmor %vm1592, %vm1593
    %v1595 = vsel %vm1594, %v1586, %v1591
    %v1596 = vmul.f32 %v1560, %v1595
    %v1598 = vrot.slane %v1596, 6
    %v1600 = vrot.slane %v1596, 4
    %v1602 = vrot.slane %v1596, 2
    %v1604 = vsel %vm62, %v1596, %v1598
    %v1605 = vsel %vm678, %v1604, %v1600
    %v1606 = vsel %vm680, %v1605, %v1602
    %v1607 = vmul.f32 %v1606, %v1406
    %v1608 = vmul.f32 %v1606, %v1409
    %v1610 = vsel %vm1436, %v1607, 0
    %v1613 = vsel %vm1436, %v1608, 0
    %1615 = vmatpush.msra.mxu0 0.0
    %1616 = vmatpush.msra.mxu0 0.0
    %1617 = vmatpush.msra.mxu0 0.0
    %1618 = vmatpush.msra.mxu0 0.0
    %1619 = vmatpush.msra.mxu0 0.0
    %1620 = vmatpush.msra.mxu0 0.0
    %1621 = vmatpush.msra.mxu0 0.0
    %1622 = vmatpush.msra.mxu0 0.0
    %1623 = vmatpush.msra.mxu0 0.0
    %1624 = vmatpush.msra.mxu0 0.0
    %1625 = vmatpush.msra.mxu0 0.0
    %1626 = vmatpush.msra.mxu0 0.0
    %1627 = vmatpush.msra.mxu0 %v1442
    %1628 = vmatpush.msra.mxu0 %v1376
    %1629 = vmatpush.msra.mxu0 %v1375
    %1630 = vmatpush.msra.mxu0 %v1374
    %1631 = vmatmul.f32.gmra.mxu0 %v1610
    %v1632 = vpop.f32.mrf.mxu0
    %v1633 = vadd.f32 0.0, %v1632
    %1634 = vmatmul.f32.gmra.mxu0 %v1613
    %v1635 = vpop.f32.mrf.mxu0
    %v1636 = vadd.f32 0.0, %v1635
    %1637 = vdwg.mxu0
    %v1638 = vsel %vm1436, %v1633, -inf
    %1639 = vmax.xlane.f32.xlu0 %v1638
    %v1640 = vpop.xlane.xlu0 %1639
    %v1641 = vsel %vm1436, %v1636, -inf
    %1642 = vmax.xlane.f32.xlu0 %v1641
    %v1643 = vpop.xlane.xlu0 %1642
    %v1644 = vsub.f32 %v1633, %v1640
    %v1645 = vsub.f32 %v1636, %v1643
    %v1646 = vmul.f32 %v1644, 1.442695
    %v1647 = vpow.pop %v1646
    %v1648 = vmul.f32 %v1645, 1.442695
    %v1649 = vpow.pop %v1648
    %v1650 = vsel %vm1436, %v1647, 0.0
    %1651 = vadd.xlane.f32.xlu0 %v1650
    %v1652 = vpop.xlane.xlu0 %1651
    %v1653 = vsel %vm1436, %v1649, 0.0
    %1654 = vadd.xlane.f32.xlu0 %v1653
    %v1655 = vpop.xlane.xlu0 %1654
    %v1656 = vrcp.pop %v1652
    %v1657 = vrcp.pop %v1655
    %v1658 = vmul.f32 %v1656, 5.0
    %v1659 = vmul.f32 %v1657, 5.0
    %v1660 = vmul.f32 %v1647, %v1658
    %v1661 = vmul.f32 %v1649, %v1659
    %v1662 = vmul.f32 %v1660, %v1406
    %v1663 = vmul.f32 %v1661, %v1409
    %1664 = vmatpush.msra.mxu0 0.0
    %1665 = vmatpush.msra.mxu0 0.0
    %1666 = vmatpush.msra.mxu0 0.0
    %1667 = vmatpush.msra.mxu0 0.0
    %1668 = vmatpush.msra.mxu0 0.0
    %1669 = vmatpush.msra.mxu0 0.0
    %1670 = vmatpush.msra.mxu0 0.0
    %1671 = vmatpush.msra.mxu0 0.0
    %1672 = vmatpush.msra.mxu0 0.0
    %1673 = vmatpush.msra.mxu0 0.0
    %1674 = vmatpush.msra.mxu0 0.0
    %1675 = vmatpush.msra.mxu0 0.0
    %1676 = vmatpush.msra.mxu0 0.0
    %1677 = vmatpush.msra.mxu0 0.0
    %1678 = vmatpush.msra.mxu0 %v1663
    %1679 = vmatpush.msra.mxu0 %v1662
    %1680 = vmatmul.f32.gmra.mxu0 %v1412
    %v1681 = vpop.f32.mrf.mxu0
    %v1682 = vadd.f32 0.0, %v1681
    %1683 = vdwg.mxu0
    %v1684 = vmul.f32 %v1682, %v1682
    %v1686 = vsel %vm1436, %v1684, 0
    %1688 = vmatpush.msra.mxu0 0.0
    %1689 = vmatpush.msra.mxu0 0.0
    %1690 = vmatpush.msra.mxu0 0.0
    %1691 = vmatpush.msra.mxu0 0.0
    %1692 = vmatpush.msra.mxu0 0.0
    %1693 = vmatpush.msra.mxu0 0.0
    %1694 = vmatpush.msra.mxu0 0.0
    %1695 = vmatpush.msra.mxu0 0.0
    %1696 = vmatpush.msra.mxu0 0.0
    %1697 = vmatpush.msra.mxu0 0.0
    %1698 = vmatpush.msra.mxu0 0.0
    %1699 = vmatpush.msra.mxu0 0.0
    %1700 = vmatpush.msra.mxu0 %v1442
    %1701 = vmatpush.msra.mxu0 %v1376
    %1702 = vmatpush.msra.mxu0 %v1375
    %1703 = vmatpush.msra.mxu0 %v1374
    %1704 = vmatmul.f32.gmra.mxu0 %v1686
    %v1705 = vpop.f32.mrf.mxu0
    %v1706 = vadd.f32 1e-07, %v1705
    %1707 = vdwg.mxu0
    %v1708 = vrsqrt.pop %v1706
    %v1709 = vmul.f32 %v1708, %v1706
    %v1710 = vmul.f32 %v1709, %v1708
    %v1711 = vmul.f32 0.5, %v1710
    %v1712 = vsub.f32 1.5, %v1711
    %v1713 = vmul.f32 %v1708, %v1712
    %vm1714 = vweird.f32 %v1706
    %vm1715 = vweird.f32 %v1708
    %vm1716 = vmor %vm1714, %vm1715
    %v1717 = vsel %vm1716, %v1708, %v1713
    %v1718 = vmul.f32 %v1682, %v1717
    %v1720 = vrot.slane %v1718, 6
    %v1722 = vrot.slane %v1718, 4
    %v1724 = vrot.slane %v1718, 2
    %v1726 = vsel %vm62, %v1718, %v1720
    %v1727 = vsel %vm678, %v1726, %v1722
    %v1728 = vsel %vm680, %v1727, %v1724
    %v1729 = vmul.f32 %v1728, %v1406
    %v1730 = vmul.f32 %v1728, %v1409
    %v1732 = vsel %vm1436, %v1729, 0
    %v1735 = vsel %vm1436, %v1730, 0
    %1737 = vmatpush.msra.mxu0 0.0
    %1738 = vmatpush.msra.mxu0 0.0
    %1739 = vmatpush.msra.mxu0 0.0
    %1740 = vmatpush.msra.mxu0 0.0
    %1741 = vmatpush.msra.mxu0 0.0
    %1742 = vmatpush.msra.mxu0 0.0
    %1743 = vmatpush.msra.mxu0 0.0
    %1744 = vmatpush.msra.mxu0 0.0
    %1745 = vmatpush.msra.mxu0 0.0
    %1746 = vmatpush.msra.mxu0 0.0
    %1747 = vmatpush.msra.mxu0 0.0
    %1748 = vmatpush.msra.mxu0 0.0
    %1749 = vmatpush.msra.mxu0 %v1442
    %1750 = vmatpush.msra.mxu0 %v1376
    %1751 = vmatpush.msra.mxu0 %v1375
    %1752 = vmatpush.msra.mxu0 %v1374
    %1753 = vmatmul.f32.gmra.mxu0 %v1732
    %v1754 = vpop.f32.mrf.mxu0
    %v1755 = vadd.f32 0.0, %v1754
    %1756 = vmatmul.f32.gmra.mxu0 %v1735
    %v1757 = vpop.f32.mrf.mxu0
    %v1758 = vadd.f32 0.0, %v1757
    %1759 = vdwg.mxu0
    %v1760 = vsel %vm1436, %v1755, -inf
    %1761 = vmax.xlane.f32.xlu0 %v1760
    %v1762 = vpop.xlane.xlu0 %1761
    %v1763 = vsel %vm1436, %v1758, -inf
    %1764 = vmax.xlane.f32.xlu0 %v1763
    %v1765 = vpop.xlane.xlu0 %1764
    %v1766 = vsub.f32 %v1755, %v1762
    %v1767 = vsub.f32 %v1758, %v1765
    %v1768 = vmul.f32 %v1766, 1.442695
    %v1769 = vpow.pop %v1768
    %v1770 = vmul.f32 %v1767, 1.442695
    %v1771 = vpow.pop %v1770
    %v1772 = vsel %vm1436, %v1769, 0.0
    %1773 = vadd.xlane.f32.xlu0 %v1772
    %v1774 = vpop.xlane.xlu0 %1773
    %v1775 = vsel %vm1436, %v1771, 0.0
    %1776 = vadd.xlane.f32.xlu0 %v1775
    %v1777 = vpop.xlane.xlu0 %1776
    %v1778 = vrcp.pop %v1774
    %v1779 = vrcp.pop %v1777
    %v1780 = vmul.f32 %v1778, 5.0
    %v1781 = vmul.f32 %v1779, 5.0
    %v1782 = vmul.f32 %v1769, %v1780
    %v1783 = vmul.f32 %v1771, %v1781
    %v1784 = vmul.f32 %v1782, %v1406
    %v1785 = vmul.f32 %v1783, %v1409
    %1786 = vmatpush.msra.mxu0 0.0
    %1787 = vmatpush.msra.mxu0 0.0
    %1788 = vmatpush.msra.mxu0 0.0
    %1789 = vmatpush.msra.mxu0 0.0
    %1790 = vmatpush.msra.mxu0 0.0
    %1791 = vmatpush.msra.mxu0 0.0
    %1792 = vmatpush.msra.mxu0 0.0
    %1793 = vmatpush.msra.mxu0 0.0
    %1794 = vmatpush.msra.mxu0 0.0
    %1795 = vmatpush.msra.mxu0 0.0
    %1796 = vmatpush.msra.mxu0 0.0
    %1797 = vmatpush.msra.mxu0 0.0
    %1798 = vmatpush.msra.mxu0 0.0
    %1799 = vmatpush.msra.mxu0 0.0
    %1800 = vmatpush.msra.mxu0 %v1785
    %1801 = vmatpush.msra.mxu0 %v1784
    %1802 = vmatmul.f32.gmra.mxu0 %v1412
    %v1803 = vpop.f32.mrf.mxu0
    %v1804 = vadd.f32 0.0, %v1803
    %1805 = vdwg.mxu0
    %v1806 = vmul.f32 %v1804, %v1804
    %v1808 = vsel %vm1436, %v1806, 0
    %1810 = vmatpush.msra.mxu0 0.0
    %1811 = vmatpush.msra.mxu0 0.0
    %1812 = vmatpush.msra.mxu0 0.0
    %1813 = vmatpush.msra.mxu0 0.0
    %1814 = vmatpush.msra.mxu0 0.0
    %1815 = vmatpush.msra.mxu0 0.0
    %1816 = vmatpush.msra.mxu0 0.0
    %1817 = vmatpush.msra.mxu0 0.0
    %1818 = vmatpush.msra.mxu0 0.0
    %1819 = vmatpush.msra.mxu0 0.0
    %1820 = vmatpush.msra.mxu0 0.0
    %1821 = vmatpush.msra.mxu0 0.0
    %1822 = vmatpush.msra.mxu0 %v1442
    %1823 = vmatpush.msra.mxu0 %v1376
    %1824 = vmatpush.msra.mxu0 %v1375
    %1825 = vmatpush.msra.mxu0 %v1374
    %1826 = vmatmul.f32.gmra.mxu0 %v1808
    %v1827 = vpop.f32.mrf.mxu0
    %v1828 = vadd.f32 1e-07, %v1827
    %1829 = vdwg.mxu0
    %v1830 = vrsqrt.pop %v1828
    %v1831 = vmul.f32 %v1830, %v1828
    %v1832 = vmul.f32 %v1831, %v1830
    %v1833 = vmul.f32 0.5, %v1832
    %v1834 = vsub.f32 1.5, %v1833
    %v1835 = vmul.f32 %v1830, %v1834
    %vm1836 = vweird.f32 %v1828
    %vm1837 = vweird.f32 %v1830
    %vm1838 = vmor %vm1836, %vm1837
    %v1839 = vsel %vm1838, %v1830, %v1835
    %v1840 = vmul.f32 %v1804, %v1839
    %v1841 = vld [vmem:[#allocation2 + $0x218] sm:$0x1]
    %v1842 = vld [vmem:[#allocation2 + $0x110] sm:$0x1]
    %v1843 = vperm.slane %v1842, 0
    %v1844 = vmul.f32 %v1840, %v1843
    %vm1845 = vcmask 197632
    %v1846 = vsel %vm1845, %v1844, 0.0
    %1847 = vadd.xlane.f32.xlu0 %v1846
    %v1848 = vpop.xlane.xlu0 %1847
    %v1849 = vperm.slane %v1841, 0
    %v1850 = vadd.f32 %v1848, %v1849
    %v1851 = vmax.f32 %v1850, 0.0
    %1852 = vrot.lane.b32.xlu0 %v1372, 32
    %v1853 = vpop.permute.xlu0 %1852
    %1854 = vrot.lane.b32.xlu0 %v1373, 32
    %v1855 = vpop.permute.xlu0 %1854
    %v1858 = vsel %vm130, %v723, %v1853
    %v1859 = vsel %vm130, %v724, %v1855
    %v1860 = vld [vmem:[#allocation2 + $0x118] sm:$0xff]
    %v1861 = vld [vmem:[#allocation2 + $0x120] sm:$0xff]
    %v1862 = vld [vmem:[#allocation2 + $0x128] sm:$0xff]
    %v1863 = vld [vmem:[#allocation2 + $0x130] sm:$0xff]
    %v1864 = vld [vmem:[#allocation2 + $0x138] sm:$0xff]
    %v1865 = vld [vmem:[#allocation2 + $0x140] sm:$0xff]
    %v1866 = vld [vmem:[#allocation2 + $0x148] sm:$0xff]
    %v1867 = vld [vmem:[#allocation2 + $0x150] sm:$0xff]
    %v1868 = vld [vmem:[#allocation2 + $0x158] sm:$0xff]
    %v1869 = vld [vmem:[#allocation2 + $0x160] sm:$0xff]
    %vm1870 = vcmask 523264
    %v1872 = vsel %vm1870, %v1858, 0
    %v1875 = vsel %vm1870, %v1859, 0
    %1877 = vmatpush.msra.mxu0 0.0
    %1878 = vmatpush.msra.mxu0 0.0
    %1879 = vmatpush.msra.mxu0 0.0
    %1880 = vmatpush.msra.mxu0 0.0
    %1881 = vmatpush.msra.mxu0 0.0
    %1882 = vmatpush.msra.mxu0 0.0
    %1883 = vmatpush.msra.mxu0 0.0
    %1884 = vmatpush.msra.mxu0 0.0
    %1885 = vmatpush.msra.mxu0 %v1867
    %1886 = vmatpush.msra.mxu0 %v1866
    %1887 = vmatpush.msra.mxu0 %v1865
    %1888 = vmatpush.msra.mxu0 %v1864
    %1889 = vmatpush.msra.mxu0 %v1863
    %1890 = vmatpush.msra.mxu0 %v1862
    %1891 = vmatpush.msra.mxu0 %v1861
    %1892 = vmatpush.msra.mxu0 %v1860
    %1893 = vmatmul.f32.gmra.mxu0 %v1872
    %v1894 = vpop.f32.mrf.mxu0
    %v1895 = vadd.f32 %v1868, %v1894
    %1896 = vmatmul.f32.gmra.mxu0 %v1875
    %v1897 = vpop.f32.mrf.mxu0
    %v1898 = vadd.f32 %v1869, %v1897
    %1899 = vdwg.mxu0
    %v1900 = vtanh.pop %v1895
    %v1901 = vtanh.pop %v1898
    %v1902 = vmul.f32 %v1900, 1.442695
    %v1903 = vpow.pop %v1902
    %v1904 = vmul.f32 %v1901, 1.442695
    %v1905 = vpow.pop %v1904
    %1906 = vmatpush.msra.mxu0 0.0
    %1907 = vmatpush.msra.mxu0 0.0
    %1908 = vmatpush.msra.mxu0 0.0
    %1909 = vmatpush.msra.mxu0 0.0
    %1910 = vmatpush.msra.mxu0 0.0
    %1911 = vmatpush.msra.mxu0 0.0
    %1912 = vmatpush.msra.mxu0 0.0
    %1913 = vmatpush.msra.mxu0 0.0
    %1914 = vmatpush.msra.mxu0 0.0
    %1915 = vmatpush.msra.mxu0 0.0
    %1916 = vmatpush.msra.mxu0 0.0
    %1917 = vmatpush.msra.mxu0 0.0
    %1918 = vmatpush.msra.mxu0 0.0
    %1919 = vmatpush.msra.mxu0 0.0
    %1920 = vmatpush.msra.mxu0 %v1905
    %1921 = vmatpush.msra.mxu0 %v1903
    %1922 = vmatmul.f32.gmra.mxu0 %v1412
    %v1923 = vpop.f32.mrf.mxu0
    %v1924 = vadd.f32 1e-07, %v1923
    %1925 = vdwg.mxu0
    %v1926 = vrcp.pop %v1924
    %1928 = vset.pattern.permute.xlu0 0
    %1929 = vperm.xlu0 %1928, %v1903
    %v1930 = vpop.permute.xlu0 %1929
    %1933 = vset.pattern.permute.xlu0 0
    %1934 = vperm.xlu0 %1933, %v1905
    %v1935 = vpop.permute.xlu0 %1934
    %v1937 = vmul.f32 %v1930, %v723
    %v1938 = vmul.f32 %v1935, %v724
    %1939 = vmatpush.msra.mxu0 0.0
    %1940 = vmatpush.msra.mxu0 0.0
    %1941 = vmatpush.msra.mxu0 0.0
    %1942 = vmatpush.msra.mxu0 0.0
    %1943 = vmatpush.msra.mxu0 0.0
    %1944 = vmatpush.msra.mxu0 0.0
    %1945 = vmatpush.msra.mxu0 0.0
    %1946 = vmatpush.msra.mxu0 0.0
    %1947 = vmatpush.msra.mxu0 0.0
    %1948 = vmatpush.msra.mxu0 0.0
    %1949 = vmatpush.msra.mxu0 0.0
    %1950 = vmatpush.msra.mxu0 0.0
    %1951 = vmatpush.msra.mxu0 0.0
    %1952 = vmatpush.msra.mxu0 0.0
    %1953 = vmatpush.msra.mxu0 %v1938
    %1954 = vmatpush.msra.mxu0 %v1937
    %1955 = vmatmul.f32.gmra.mxu0 %v1412
    %v1956 = vpop.f32.mrf.mxu0
    %v1957 = vadd.f32 0.0, %v1956
    %1958 = vdwg.mxu0
    %1960 = vset.pattern.permute.xlu0 0
    %1961 = vperm.xlu0 %1960, %v1926
    %v1962 = vpop.permute.xlu0 %1961
    %v1964 = vmul.f32 %v1957, %v1962
    %1965 = vset.pattern.permute.xlu0 1
    %1966 = vperm.xlu0 %1965, %v1903
    %v1967 = vpop.permute.xlu0 %1966
    %1969 = vset.pattern.permute.xlu0 1
    %1970 = vperm.xlu0 %1969, %v1905
    %v1971 = vpop.permute.xlu0 %1970
    %v1973 = vmul.f32 %v1967, %v1372
    %v1974 = vmul.f32 %v1971, %v1373
    %1975 = vmatpush.msra.mxu0 0.0
    %1976 = vmatpush.msra.mxu0 0.0
    %1977 = vmatpush.msra.mxu0 0.0
    %1978 = vmatpush.msra.mxu0 0.0
    %1979 = vmatpush.msra.mxu0 0.0
    %1980 = vmatpush.msra.mxu0 0.0
    %1981 = vmatpush.msra.mxu0 0.0
    %1982 = vmatpush.msra.mxu0 0.0
    %1983 = vmatpush.msra.mxu0 0.0
    %1984 = vmatpush.msra.mxu0 0.0
    %1985 = vmatpush.msra.mxu0 0.0
    %1986 = vmatpush.msra.mxu0 0.0
    %1987 = vmatpush.msra.mxu0 0.0
    %1988 = vmatpush.msra.mxu0 0.0
    %1989 = vmatpush.msra.mxu0 %v1974
    %1990 = vmatpush.msra.mxu0 %v1973
    %1991 = vmatmul.f32.gmra.mxu0 %v1412
    %v1992 = vpop.f32.mrf.mxu0
    %v1993 = vadd.f32 0.0, %v1992
    %1994 = vdwg.mxu0
    %1995 = vset.pattern.permute.xlu0 1
    %1996 = vperm.xlu0 %1995, %v1926
    %v1997 = vpop.permute.xlu0 %1996
    %v1999 = vmul.f32 %v1993, %v1997
    %v2001 = vadd.f32 %v854, %v924
    %v2002 = vrot.slane %v1060, 2
    %v2004 = vadd.f32 %v991, %v2002
    %v2006 = vadd.f32 %v1126, %v1196
    %v2007 = vrot.slane %v1332, 2
    %v2009 = vadd.f32 %v1263, %v2007
    %v2011 = vrot.slane %v2004, 4
    %v2013 = vadd.f32 %v2001, %v2011
    %v2015 = vrot.slane %v2009, 4
    %v2017 = vadd.f32 %v2006, %v2015
    %v2018 = vadd.f32 %v2013, %v2017
    %v2019 = vmul.f32 %v2018, 0.125
    %v2020 = vmax.f32 %v854, %v924
    %v2021 = vmax.f32 %v991, %v2002
    %v2022 = vmax.f32 %v1126, %v1196
    %v2023 = vmax.f32 %v1263, %v2007
    %v2025 = vrot.slane %v2021, 4
    %v2027 = vmax.f32 %v2020, %v2025
    %v2029 = vrot.slane %v2023, 4
    %v2031 = vmax.f32 %v2022, %v2029
    %v2032 = vmax.f32 %v2027, %v2031
    %2034 = vrot.lane.b32.xlu0 %v1999, 32
    %v2035 = vpop.permute.xlu0 %2034
    %2038 = vrot.lane.b32.xlu0 %v2019, 32
    %v2039 = vpop.permute.xlu0 %2038
    %2042 = vrot.lane.b32.xlu0 %v2032, 64
    %v2043 = vpop.permute.xlu0 %2042
    %v2045 = vsel %vm130, %v1964, %v2035
    %v2046 = vsel %vm1870, %v2045, %v2039
    %vm2047 = vcmask 785408
    %v2048 = vsel %vm2047, %v2046, %v2043
    %v2049 = vsel %vm62, %v2048, 0.0
    %2050 = vadd.xlane.f32.xlu0 %v2049
    %v2051 = vpop.xlane.xlu0 %2050
    %v2052 = vadd.f32 %v2051, %v1851
    %v2053 = vmul.f32 %v2052, 0.007751938
    %2055 = vset.pattern.permute.xlu0 0
    %2056 = vperm.xlu0 %2055, %v2053
    %v2057 = vpop.permute.xlu0 %2056
    %v2059 = vsub.f32 %v2048, %v2057
    %v2060 = vsub.f32 %v1851, %v2053
    %v2061 = vmul.f32 %v2059, %v2059
    %v2062 = vsel %vm62, %v2061, 0.0
    %2063 = vadd.xlane.f32.xlu0 %v2062
    %v2064 = vpop.xlane.xlu0 %2063
    %v2065 = vmul.f32 %v2060, %v2060
    %v2066 = vadd.f32 %v2064, %v2065
    %v2067 = vmul.f32 %v2066, 0.007751938
    %v2068 = vadd.f32 %v2067, 1e-05
    %v2069 = vrsqrt.pop %v2068
    %v2070 = vmul.f32 %v2069, %v2068
    %v2071 = vmul.f32 %v2070, %v2069
    %v2072 = vmul.f32 0.5, %v2071
    %v2073 = vsub.f32 1.5, %v2072
    %v2074 = vmul.f32 %v2069, %v2073
    %vm2075 = vweird.f32 %v2068
    %vm2076 = vweird.f32 %v2069
    %vm2077 = vmor %vm2075, %vm2076
    %v2078 = vsel %vm2077, %v2069, %v2074
    %2080 = vset.pattern.permute.xlu0 0
    %2081 = vperm.xlu0 %2080, %v2078
    %v2082 = vpop.permute.xlu0 %2081
    %v2084 = vmul.f32 %v2059, %v2082
    %v2085 = vld [vmem:[#allocation2 + $0x168] sm:$0x1]
    %v2086 = vperm.slane %v2085, 0
    %v2087 = vmul.f32 %v2084, %v2086
    %v2088 = vld [vmem:[#allocation2 + $0x170] sm:$0x1]
    %v2089 = vperm.slane %v2088, 0
    %v2090 = vadd.f32 %v2087, %v2089
    %v2091 = vmax.f32 %v2090, 0.0
    %v2092 = vmul.f32 %v2060, %v2078
    %2094 = vrot.lane.b32.xlu0 %v1849, 127
    %v2095 = vpop.permute.xlu0 %2094
    %v2097 = vmul.f32 %v2092, %v2095
    %2098 = vrot.lane.b32.xlu0 %v1849, 126
    %v2099 = vpop.permute.xlu0 %2098
    %v2101 = vadd.f32 %v2097, %v2099
    %v2102 = vmax.f32 %v2101, 0.0
    %v2103 = vld [vmem:[#allocation2 + $0x178] sm:$0xff]
    %v2104 = vld [vmem:[#allocation2 + $0x180] sm:$0xff]
    %v2105 = vld [vmem:[#allocation2 + $0x188] sm:$0xff]
    %v2106 = vld [vmem:[#allocation2 + $0x190] sm:$0xff]
    %v2107 = vld [vmem:[#allocation2 + $0x198] sm:$0xff]
    %v2108 = vld [vmem:[#allocation2 + $0x1a0] sm:$0xff]
    %v2109 = vld [vmem:[#allocation2 + $0x1a8] sm:$0xff]
    %v2110 = vld [vmem:[#allocation2 + $0x1b0] sm:$0xff]
    %v2111 = vld [vmem:[#allocation2 + $0x1b8] sm:$0xff]
    %v2112 = vld [vmem:[#allocation2 + $0x1c0] sm:$0xff]
    %v2113 = vld [vmem:[#allocation2 + $0x1c8] sm:$0xff]
    %v2114 = vld [vmem:[#allocation2 + $0x1d0] sm:$0xff]
    %v2115 = vld [vmem:[#allocation2 + $0x1d8] sm:$0xff]
    %v2116 = vld [vmem:[#allocation2 + $0x1e0] sm:$0xff]
    %v2117 = vld [vmem:[#allocation2 + $0x1e8] sm:$0xff]
    %v2118 = vld [vmem:[#allocation2 + $0x1f0] sm:$0xff]
    %v2119 = vld [vmem:[#allocation2 + $0x1f8] sm:$0x1]
    %2121 = vset.pattern.permute.xlu0 0
    %2122 = vperm.xlu0 %2121, %v2102
    %v2123 = vpop.permute.xlu0 %2122
    %v2125 = vperm.slane %v2119, 0
    %v2126 = vmul.f32 %v2123, %v2125
    %2127 = vmatpush.msra.mxu0 %v2118
    %2128 = vmatpush.msra.mxu0 %v2117
    %2129 = vmatpush.msra.mxu0 %v2116
    %2130 = vmatpush.msra.mxu0 %v2115
    %2131 = vmatpush.msra.mxu0 %v2114
    %2132 = vmatpush.msra.mxu0 %v2113
    %2133 = vmatpush.msra.mxu0 %v2112
    %2134 = vmatpush.msra.mxu0 %v2111
    %2135 = vmatpush.msra.mxu0 %v2110
    %2136 = vmatpush.msra.mxu0 %v2109
    %2137 = vmatpush.msra.mxu0 %v2108
    %2138 = vmatpush.msra.mxu0 %v2107
    %2139 = vmatpush.msra.mxu0 %v2106
    %2140 = vmatpush.msra.mxu0 %v2105
    %2141 = vmatpush.msra.mxu0 %v2104
    %2142 = vmatpush.msra.mxu0 %v2103
    %2143 = vmatmul.f32.gmra.mxu0 %v2091
    %v2144 = vpop.f32.mrf.mxu0
    %v2145 = vadd.f32 %v2126, %v2144
    %2146 = vdwg.mxu0
    %v2147 = vld [vmem:[#allocation2 + $0x200] sm:$0x1]
    %v2148 = vperm.slane %v2147, 0
    %v2149 = vadd.f32 %v2145, %v2148
    %v2150 = vld [vmem:[#allocation2 + $0x208] sm:$0x1]
    %v2151 = vperm.slane %v2150, 0
    %v2152 = vmul.f32 %v2149, %v2151
    %vm2153 = vcmask 123904
    %v2154 = vsel %vm2153, %v2152, 0.0
    %2155 = vadd.xlane.f32.xlu0 %v2154
    %v2156 = vpop.xlane.xlu0 %2155
    %v2157 = vadd.f32 %v2156, %v1849
    %2159 = vrot.lane.b32.xlu0 %v2157, 125
    %v2160 = vpop.permute.xlu0 %2159
    %vm2162 = vcmask 1024
    %2163 = vst.msk [vmem:[%s2] sm:$0x3] %vm2162, %v2160
    // Predicated region
    $region14: #{toxic_forward.1} parent=1 // pred_check
      _
    $region15: #{toxic_forward.1} parent=1 // pred_check_branch
      %2165 = sbr.rel (0) target = $region17
    $region16: #{toxic_forward.1} parent=1 // pred_region
      _
    $region17: #{toxic_forward.1} parent=1 // pred_fallthru
      _
    // Predicated region
    $region18: #{toxic_forward.1} parent=1 // pred_check
      _
    $region19: #{toxic_forward.1} parent=1 // pred_check_branch
      %2167 = sbr.rel (0) target = $region21
    $region20: #{toxic_forward.1} parent=1 // pred_region
      _
    $region21: #{toxic_forward.1} parent=1 // pred_fallthru
      _
    %2168 = vsyncpa [#allocation3], 1

</llo_original>
